<compile_context>
chip_gen: v7x
topology: tpu7x:2x2x1
jax: 0.10.0
libtpu: 0.0.40
codegen_flags: <defaults>
</compile_context>

<pallas_src>
import math

import jax
import jax.numpy as jnp
from jax.experimental import pallas as pl
from jax.experimental.pallas import tpu as pltpu

PAD_IDX = 1

# ---- small stand-in sizes (PyTorch original: 512 / 1024 / mbart-large) ----
B = 2                   # batch (number of clips / sentences)
T_FRAMES = 20           # frames per clip (equal lengths -> pad_sequence is a no-op)
IMG_C, IMG_H, IMG_W = 3, 8, 8
FEAT2D = 128            # stand-in for resnet18's 512-dim per-frame feature (lane-dense)
D_MODEL = 128           # stand-in for embed_dim = 1024 (lane-dense)
N_HEADS = 4
D_HEAD = D_MODEL // N_HEADS
D_FFN = 256
VOCAB = 32
TXT_LEN = 8
MAX_POS = 32
CONV_K = 5


# ----------------------------------------------------------------------------
# In-kernel helpers (operate on VMEM-resident values)
# ----------------------------------------------------------------------------
def _mxu(a, b):
    """MXU matmul with bf16 operands, f32 accumulation.

    Weights arrive already bf16 (cast once in the wrappers), so the astype on
    them is a trace-time no-op; only activations are converted here.
    """
    return jnp.dot(a.astype(jnp.bfloat16), b.astype(jnp.bfloat16),
                   preferred_element_type=jnp.float32)


def _ln_rows(x, g, b):
    """LayerNorm over the last (lane) axis; x: (R, D) f32, g/b: (1, D)."""
    mu = jnp.mean(x, axis=-1, keepdims=True)
    var = jnp.mean((x - mu) ** 2, axis=-1, keepdims=True)
    return (x - mu) * jax.lax.rsqrt(var + 1e-5) * g + b


def _split_heads(x2, n_batch, seq):
    """(B*S, D) -> (H*B, S, Dh): heads to the batch axis, one lane-aware move."""
    x3 = x2.reshape(n_batch * seq, N_HEADS, D_HEAD)
    x3 = pltpu.einshape("mhd->hmd", x3)          # (H, B*S, Dh)
    return x3.reshape(N_HEADS * n_batch, seq, D_HEAD)


def _merge_heads(o3, n_batch, seq):
    """(H*B, S, Dh) -> (B*S, D): inverse of _split_heads (replaces lane concat)."""
    o = o3.reshape(N_HEADS, n_batch * seq, D_HEAD)
    o = pltpu.einshape("hmd->mhd", o)            # (B*S, H, Dh)
    return o.reshape(n_batch * seq, D_MODEL)


def _temporal_block(x, w, b, g, beta):
    """Conv1d(K) -> BatchNorm1d (training stats) -> ReLU -> MaxPool1d(2).

    x: (B, T, Cin) f32; w: (K, Cin, Cout) bf16; b/g/beta: (1, Cout) f32.
    Conv is a single im2col matmul (lane-concat of the K taps, K-dim = K*Cin),
    which fills the 256-deep MXU on v6e/v7x.
    TODO(synk): the k=1..4 shifted taps are sublane-misaligned (T_out not a
    multiple of 8); pad T_out / stage xcol in scratch at prod frame counts.
    """
    Bb, T, Cin = x.shape
    K, _, Cout = w.shape
    T_out = T - K + 1
    taps = [x[:, k:k + T_out, :] for k in range(K)]
    xcol = jnp.concatenate(taps, axis=-1).reshape(Bb * T_out, K * Cin)
    wcol = w.reshape(K * Cin, Cout)
    acc = _mxu(xcol, wcol) + b
    # BatchNorm1d, training-mode batch statistics (biased variance) per channel.
    mu = jnp.mean(acc, axis=0, keepdims=True)
    var = jnp.mean((acc - mu) ** 2, axis=0, keepdims=True)
    y = (acc - mu) * jax.lax.rsqrt(var + 1e-5) * g + beta
    y = jnp.maximum(y, 0.0)
    # MaxPool1d(kernel=2, ceil_mode=False): drop trailing odd element if any.
    T_pool = T_out // 2
    y = y.reshape(Bb, T_out, Cout)[:, :2 * T_pool, :].reshape(Bb, T_pool, 2, Cout)
    return jnp.max(y, axis=2)


def _encoder_compute(x, mask, pos,
                     ln_emb_g, ln_emb_b, ln1_g, ln1_b,
                     wqkv, bqkv, wo, bo,
                     ln2_g, ln2_b, w1, b1, w2, b2,
                     lnf_g, lnf_b):
    """Single pre-LN MBart-style encoder layer, fully VMEM-resident.

    TODO(synk): pretrained MBart-large encoder weights + LoRA adapters (PEFT)
    cannot be loaded here; deterministic randomly-initialized stand-in.
    """
    Bb, S, D = x.shape

    x2 = (x + pos[None, :, :]).reshape(Bb * S, D)
    x2 = _ln_rows(x2, ln_emb_g, ln_emb_b)

    # ---- self attention: fused QKV matmul + head-batched dot_generals ----
    h = _ln_rows(x2, ln1_g, ln1_b)
    qkv = _mxu(h, wqkv) + bqkv                                # (B*S, 3D) lane-dense
    scale = 1.0 / math.sqrt(D_HEAD)                           # MBart scales Q
    # 128-aligned lane slices (free), then heads -> batch axis (no 32-lane slices).
    q3 = _split_heads(qkv[:, 0:D] * scale, Bb, S)             # (H*B, S, Dh)
    k3 = _split_heads(qkv[:, D:2 * D], Bb, S)
    v3 = _split_heads(qkv[:, 2 * D:3 * D], Bb, S)

    # Additive key mask (1 = keep), built ONCE per layer for all heads.
    bias = jnp.broadcast_to(((1.0 - mask) * (-1e9))[None, :, None, :],
                            (N_HEADS, Bb, 1, S)).reshape(N_HEADS * Bb, 1, S)

    s = jnp.einsum('bqd,bkd->bqk',
                   q3.astype(jnp.bfloat16), k3.astype(jnp.bfloat16),
                   preferred_element_type=jnp.float32)
    s = s + bias
    s = s - jnp.max(s, axis=-1, keepdims=True)                # softmax in f32
    p = jnp.exp(s)
    p = p / jnp.sum(p, axis=-1, keepdims=True)                # exact denominator
    o3 = jnp.einsum('bqk,bkd->bqd',
                    p.astype(jnp.bfloat16), v3.astype(jnp.bfloat16),
                    preferred_element_type=jnp.float32)
    attn = _merge_heads(o3, Bb, S)                            # (B*S, D) lane-dense
    x2 = x2 + _mxu(attn, wo) + bo

    # ---- feed-forward ----
    h = _ln_rows(x2, ln2_g, ln2_b)
    # TODO(synk): MBart uses exact (erf) GELU; tanh approximation kept here.
    h = jax.nn.gelu(_mxu(h, w1) + b1, approximate=True)
    x2 = x2 + _mxu(h, w2) + b2

    x2 = _ln_rows(x2, lnf_g, lnf_b)
    return x2.reshape(Bb, S, D)


# ----------------------------------------------------------------------------
# Pallas kernels
# ----------------------------------------------------------------------------
def _frontend_kernel(frames_ref, res_w_ref,
                     tc1_w_ref, tc1_b_ref, tc1_g_ref, tc1_bt_ref,
                     tc2_w_ref, tc2_b_ref, tc2_g_ref, tc2_bt_ref,
                     o_ref):
    # FeatureExtracter stand-in: per-frame linear feature + TemporalConv x2.
    # TODO(synk): pretrained ResNet18 backbone is not translatable; stand-in is
    # a linear projection of the flattened NCHW frame.
    Bb = o_ref.shape[0]
    n_frames = frames_ref.shape[0]
    T = n_frames // Bb
    feats = _mxu(frames_ref[...], res_w_ref[...])             # (B*T, FEAT2D)
    x = feats.reshape(Bb, T, feats.shape[-1])
    x = _temporal_block(x, tc1_w_ref[...], tc1_b_ref[...],
                        tc1_g_ref[...], tc1_bt_ref[...])
    x = _temporal_block(x, tc2_w_ref[...], tc2_b_ref[...],
                        tc2_g_ref[...], tc2_bt_ref[...])
    o_ref[...] = x


def _encoder_kernel(x_ref, m_ref, pos_ref,
                    ln_emb_g, ln_emb_b, ln1_g, ln1_b,
                    wqkv, bqkv, wo, bo,
                    ln2_g, ln2_b, w1, b1, w2, b2,
                    lnf_g, lnf_b,
                    o_ref):
    o_ref[...] = _encoder_compute(
        x_ref[...], m_ref[...], pos_ref[...],
        ln_emb_g[...], ln_emb_b[...], ln1_g[...], ln1_b[...],
        wqkv[...], bqkv[...], wo[...], bo[...],
        ln2_g[...], ln2_b[...], w1[...], b1[...], w2[...], b2[...],
        lnf_g[...], lnf_b[...])


def _encoder_head_kernel(x_ref, m_ref, pos_ref,
                         ln_emb_g, ln_emb_b, ln1_g, ln1_b,
                         wqkv, bqkv, wo, bo,
                         ln2_g, ln2_b, w1, b1, w2, b2,
                         lnf_g, lnf_b, head_w,
                         feat_ref):
    hidden = _encoder_compute(
        x_ref[...], m_ref[...], pos_ref[...],
        ln_emb_g[...], ln_emb_b[...], ln1_g[...], ln1_b[...],
        wqkv[...], bqkv[...], wo[...], bo[...],
        ln2_g[...], ln2_b[...], w1[...], b1[...], w2[...], b2[...],
        lnf_g[...], lnf_b[...])
    Bb, _, D = hidden.shape
    cls = hidden[:, 0:1, :].reshape(Bb, D)                    # CLS position
    feat_ref[...] = _mxu(cls, head_w[...])                    # image_head (no bias)


def _clip_head_kernel(img_ref, txt_ref, ls_ref, lpi_ref):
    img = img_ref[...]
    txt = txt_ref[...]
    # 1e-12 only guards the exact-zero-vector case; otherwise matches x / x.norm().
    img = img * jax.lax.rsqrt(jnp.sum(img * img, axis=-1, keepdims=True) + 1e-12)
    txt = txt * jax.lax.rsqrt(jnp.sum(txt * txt, axis=-1, keepdims=True) + 1e-12)
    scale = jnp.exp(ls_ref[...])                              # (1, 1), broadcasts
    # Tiny (B, B) output: keep the logits matmul in f32 for reference fidelity.
    lpi_ref[...] = scale * jax.lax.dot_general(
        img, txt, (((1,), (1,)), ((), ())), preferred_element_type=jnp.float32)


# ----------------------------------------------------------------------------
# Wrappers / glue (reshapes, embedding lookup, parameter plumbing)
# ----------------------------------------------------------------------------
_ENC_PARAM_ORDER = ('ln_emb_g', 'ln_emb_b', 'ln1_g', 'ln1_b', 'wqkv', 'bqkv',
                    'wo', 'bo', 'ln2_g', 'ln2_b', 'w1', 'b1', 'w2', 'b2',
                    'lnf_g', 'lnf_b')
_ENC_BF16 = frozenset({'wqkv', 'wo', 'w1', 'w2'})   # matmul weights: bf16 once, outside kernel


def _enc_args(p):
    return tuple(p[n].astype(jnp.bfloat16) if n in _ENC_BF16 else p[n]
                 for n in _ENC_PARAM_ORDER)


def frontend_forward(params, frames_flat, batch):
    n_frames = frames_flat.shape[0]
    T = n_frames // batch
    t1 = (T - CONV_K + 1) // 2
    t2 = (t1 - CONV_K + 1) // 2
    # No grid at toy sizes (per review); TODO(synk): tile + "parallel" batch axis
    # and vmem_limit_bytes at prod frame counts.
    return pl.pallas_call(
        _frontend_kernel,
        out_shape=jax.ShapeDtypeStruct((batch, t2, D_MODEL), jnp.float32),
    )(frames_flat,
      params['res_w'].astype(jnp.bfloat16),
      params['tc1_w'].astype(jnp.bfloat16), params['tc1_b'],
      params['tc1_g'], params['tc1_beta'],
      params['tc2_w'].astype(jnp.bfloat16), params['tc2_b'],
      params['tc2_g'], params['tc2_beta'])


def encoder_forward(p, x, mask, head_w=None):
    Bb, S, D = x.shape
    pos = p['pos'][:S]
    args = (x, mask.astype(jnp.float32), pos) + _enc_args(p)
    if head_w is None:
        return pl.pallas_call(
            _encoder_kernel,
            out_shape=jax.ShapeDtypeStruct((Bb, S, D), jnp.float32),
        )(*args)
    return pl.pallas_call(
        _encoder_head_kernel,
        out_shape=jax.ShapeDtypeStruct((Bb, D), jnp.float32),
    )(*args, head_w.astype(jnp.bfloat16))


def image_clip_forward(params, src_input):
    frames = src_input['input_ids']               # (sum(lengths), C, H, W), NCHW
    lengths = src_input['src_length_batch']
    batch = len(lengths)
    n_frames = frames.shape[0]
    # TODO(synk): pad_sequence over variable-length clips; equal lengths assumed.
    frames_flat = frames.reshape(n_frames, -1)

    x = frontend_forward(params, frames_flat, batch)       # (B, N, D)
    Bb, N, C = x.shape
    cls_token = jnp.broadcast_to(params['cls_token'], (Bb, 1, C))
    x = jnp.concatenate([cls_token, x], axis=1)
    attention_mask = jnp.pad(
        src_input['attention_mask'].reshape(Bb, -1).astype(jnp.float32),
        ((0, 0), (1, 0)), constant_values=1.0)

    # Fused encoder + CLS-select + image_head (nn.Linear, bias=False).
    image_feat = encoder_forward(params['img_enc'], x, attention_mask,
                                 head_w=params['image_head_w'])
    return image_feat


def text_clip_forward(params, tgt_input):
    input_ids = tgt_input['input_ids']            # (B, L) int32
    attention_mask = tgt_input['attention_mask']
    emb = jnp.take(params['txt_emb'], input_ids, axis=0) * math.sqrt(D_MODEL)
    txt_logits = encoder_forward(params['txt_enc'], emb, attention_mask)
    idx = jnp.argmax(input_ids, axis=-1)          # CLIP-style max-token-id select
    output = txt_logits[jnp.arange(txt_logits.shape[0]), idx]
    # text_head: head_type='identy' -> Identity
    return output, txt_logits


def slrclip_head(image_features, text_features, logit_scale):
    Bn = image_features.shape[0]
    lpi = pl.pallas_call(
        _clip_head_kernel,
        out_shape=jax.ShapeDtypeStruct((Bn, Bn), jnp.float32),
    )(image_features, text_features, jnp.reshape(logit_scale, (1, 1)))
    lpt = lpi.T                                   # exact transpose of lpi
    gt = jnp.eye(Bn, dtype=jnp.float32)           # compile-time constant
    return lpi, lpt, gt


def slrclip_forward(params, src_input, tgt_input):
    # TODO(synk): on v7x, run the independent image/text encoder branches on
    # separate TensorCores (core_map / leading size-2 parallel axis) at prod sizes.
    image_features = image_clip_forward(params, src_input)
    text_features, encoder_hidden_states = text_clip_forward(params, tgt_input)
    logits_per_image, logits_per_text, ground_truth = slrclip_head(
        image_features, text_features, params['logit_scale'])
    return logits_per_image, logits_per_text, ground_truth, encoder_hidden_states


# ----------------------------------------------------------------------------
# Deterministic parameter init (f32 masters; matmul weights cast bf16 at call)
# ----------------------------------------------------------------------------
def _w(k, shape, scale=0.02):
    return jax.random.normal(k, shape, jnp.float32) * scale


def init_encoder_params(key):
    ks = jax.random.split(key, 5)
    ones = lambda n: jnp.ones((1, n), jnp.float32)
    zeros = lambda n: jnp.zeros((1, n), jnp.float32)
    return {
        'pos': _w(ks[0], (MAX_POS, D_MODEL)),
        'ln_emb_g': ones(D_MODEL), 'ln_emb_b': zeros(D_MODEL),
        'ln1_g': ones(D_MODEL), 'ln1_b': zeros(D_MODEL),
        'wqkv': _w(ks[1], (D_MODEL, 3 * D_MODEL)), 'bqkv': zeros(3 * D_MODEL),
        'wo': _w(ks[2], (D_MODEL, D_MODEL)), 'bo': zeros(D_MODEL),
        'ln2_g': ones(D_MODEL), 'ln2_b': zeros(D_MODEL),
        'w1': _w(ks[3], (D_MODEL, D_FFN)), 'b1': zeros(D_FFN),
        'w2': _w(ks[4], (D_FFN, D_MODEL)), 'b2': zeros(D_MODEL),
        'lnf_g': ones(D_MODEL), 'lnf_b': zeros(D_MODEL),
    }


def init_params(key):
    ks = jax.random.split(key, 8)
    ones = lambda n: jnp.ones((1, n), jnp.float32)
    zeros = lambda n: jnp.zeros((1, n), jnp.float32)
    return {
        'res_w': _w(ks[0], (IMG_C * IMG_H * IMG_W, FEAT2D)),
        'tc1_w': _w(ks[1], (CONV_K, FEAT2D, D_MODEL)), 'tc1_b': zeros(D_MODEL),
        'tc1_g': ones(D_MODEL), 'tc1_beta': zeros(D_MODEL),
        'tc2_w': _w(ks[2], (CONV_K, D_MODEL, D_MODEL)), 'tc2_b': zeros(D_MODEL),
        'tc2_g': ones(D_MODEL), 'tc2_beta': zeros(D_MODEL),
        'cls_token': _w(ks[3], (1, 1, D_MODEL), 1.0),
        'image_head_w': _w(ks[4], (D_MODEL, D_MODEL)),
        'txt_emb': _w(ks[5], (VOCAB, D_MODEL)),
        'img_enc': init_encoder_params(ks[6]),
        'txt_enc': init_encoder_params(ks[7]),
        'logit_scale': jnp.array(math.log(1.0 / 0.07), jnp.float32),
    }


if __name__ == "__main__":
    key = jax.random.PRNGKey(0)
    k_param, k_frames, k_ids = jax.random.split(key, 3)
    params = init_params(k_param)

    lengths = (T_FRAMES, T_FRAMES)
    frames = jax.random.normal(k_frames, (B * T_FRAMES, IMG_C, IMG_H, IMG_W),
                               jnp.float32)
    # post-TemporalConv sequence length for conv_type=2: ((T-4)//2 - 4)//2
    n_after_conv = ((T_FRAMES - 4) // 2 - 4) // 2
    src_input = {
        'input_ids': frames,
        'src_length_batch': lengths,
        'attention_mask': jnp.ones((B, n_after_conv), jnp.float32),
    }
    tgt_input = {
        'input_ids': jax.random.randint(k_ids, (B, TXT_LEN), 2, VOCAB,
                                        dtype=jnp.int32),
        'attention_mask': jnp.ones((B, TXT_LEN), jnp.float32),
    }

    lpi, lpt, gt, hidden = slrclip_forward(params, src_input, tgt_input)
    jax.block_until_ready((lpi, lpt, gt, hidden))
    assert lpi.shape == (B, B) and lpt.shape == (B, B) and gt.shape == (B, B)
    assert hidden.shape == (B, TXT_LEN, D_MODEL)
    assert gt.dtype == jnp.float32
    assert bool(jnp.all(jnp.isfinite(lpi))) and bool(jnp.all(jnp.isfinite(lpt)))
    print("KERNEL_OK")
</pallas_src>

<mosaic_0001>
module attributes {stable_mosaic.version = 11 : i64} {
  func.func @_frontend_kernel(%arg0: memref<40x192xf32, #tpu.memory_space<vmem>>, %arg1: memref<192x128xbf16, #tpu.memory_space<vmem>>, %arg2: memref<5x128x128xbf16, #tpu.memory_space<vmem>>, %arg3: memref<1x128xf32, #tpu.memory_space<vmem>>, %arg4: memref<1x128xf32, #tpu.memory_space<vmem>>, %arg5: memref<1x128xf32, #tpu.memory_space<vmem>>, %arg6: memref<5x128x128xbf16, #tpu.memory_space<vmem>>, %arg7: memref<1x128xf32, #tpu.memory_space<vmem>>, %arg8: memref<1x128xf32, #tpu.memory_space<vmem>>, %arg9: memref<1x128xf32, #tpu.memory_space<vmem>>, %arg10: memref<2x2x128xf32, #tpu.memory_space<vmem>>) attributes {dimension_semantics = [], scalar_prefetch = 0 : i64, scratch_operands = 0 : i64, tpu.core_type = #tpu.core_type<tc>} {
    %c0 = arith.constant 0 : index
    %c0_0 = arith.constant 0 : index
    %0 = vector.load %arg0[%c0, %c0_0] : memref<40x192xf32, #tpu.memory_space<vmem>>, vector<40x192xf32>
    %c0_1 = arith.constant 0 : index
    %c0_2 = arith.constant 0 : index
    %1 = vector.load %arg1[%c0_1, %c0_2] : memref<192x128xbf16, #tpu.memory_space<vmem>>, vector<192x128xbf16>
    %2 = arith.truncf %0 : vector<40x192xf32> to vector<40x192xbf16>
    %cst = arith.constant dense<0.000000e+00> : vector<40x128xf32>
    %3 = tpu.matmul %2, %1, %cst {dimension_numbers = #tpu.dot_dimension_numbers<[1], [0], [0], [1], [0, 0, 1, 1], [], []>} : vector<40x192xbf16>, vector<192x128xbf16>, vector<40x128xf32> -> vector<40x128xf32>
    %4 = vector.shape_cast %3 : vector<40x128xf32> to vector<2x20x128xf32>
    %c0_3 = arith.constant 0 : index
    %c0_4 = arith.constant 0 : index
    %c0_5 = arith.constant 0 : index
    %5 = vector.load %arg2[%c0_3, %c0_4, %c0_5] : memref<5x128x128xbf16, #tpu.memory_space<vmem>>, vector<5x128x128xbf16>
    %c0_6 = arith.constant 0 : index
    %c0_7 = arith.constant 0 : index
    %6 = vector.load %arg3[%c0_6, %c0_7] : memref<1x128xf32, #tpu.memory_space<vmem>>, vector<1x128xf32>
    %c0_8 = arith.constant 0 : index
    %c0_9 = arith.constant 0 : index
    %7 = vector.load %arg4[%c0_8, %c0_9] : memref<1x128xf32, #tpu.memory_space<vmem>>, vector<1x128xf32>
    %c0_10 = arith.constant 0 : index
    %c0_11 = arith.constant 0 : index
    %8 = vector.load %arg5[%c0_10, %c0_11] : memref<1x128xf32, #tpu.memory_space<vmem>>, vector<1x128xf32>
    %9 = vector.extract_strided_slice %4 {offsets = [0, 0, 0], sizes = [2, 16, 128], strides = [1, 1, 1]} : vector<2x20x128xf32> to vector<2x16x128xf32>
    %10 = vector.extract_strided_slice %4 {offsets = [0, 1, 0], sizes = [2, 16, 128], strides = [1, 1, 1]} : vector<2x20x128xf32> to vector<2x16x128xf32>
    %11 = vector.extract_strided_slice %4 {offsets = [0, 2, 0], sizes = [2, 16, 128], strides = [1, 1, 1]} : vector<2x20x128xf32> to vector<2x16x128xf32>
    %12 = vector.extract_strided_slice %4 {offsets = [0, 3, 0], sizes = [2, 16, 128], strides = [1, 1, 1]} : vector<2x20x128xf32> to vector<2x16x128xf32>
    %13 = vector.extract_strided_slice %4 {offsets = [0, 4, 0], sizes = [2, 16, 128], strides = [1, 1, 1]} : vector<2x20x128xf32> to vector<2x16x128xf32>
    %14 = tpu.concatenate %9, %10, %11, %12, %13 in 2 : vector<2x16x128xf32>, vector<2x16x128xf32>, vector<2x16x128xf32>, vector<2x16x128xf32>, vector<2x16x128xf32> -> vector<2x16x640xf32>
    %15 = vector.shape_cast %14 : vector<2x16x640xf32> to vector<32x640xf32>
    %16 = vector.shape_cast %5 : vector<5x128x128xbf16> to vector<640x128xbf16>
    %17 = arith.truncf %15 : vector<32x640xf32> to vector<32x640xbf16>
    %cst_12 = arith.constant dense<0.000000e+00> : vector<32x128xf32>
    %18 = tpu.matmul %17, %16, %cst_12 {dimension_numbers = #tpu.dot_dimension_numbers<[1], [0], [0], [1], [0, 0, 1, 1], [], []>} : vector<32x640xbf16>, vector<640x128xbf16>, vector<32x128xf32> -> vector<32x128xf32>
    %19 = vector.broadcast %6 : vector<1x128xf32> to vector<32x128xf32>
    %20 = arith.addf %18, %19 : vector<32x128xf32>
    %cst_13 = arith.constant dense<0.000000e+00> : vector<128xf32>
    %21 = vector.multi_reduction <add>, %20, %cst_13 [0] : vector<32x128xf32> to vector<128xf32>
    %22 = vector.shape_cast %21 : vector<128xf32> to vector<1x128xf32>
    %cst_14 = arith.constant 3.200000e+01 : f32
    %23 = vector.broadcast %cst_14 : f32 to vector<1x128xf32>
    %24 = arith.divf %22, %23 : vector<1x128xf32>
    %25 = vector.broadcast %24 : vector<1x128xf32> to vector<32x128xf32>
    %26 = arith.subf %20, %25 : vector<32x128xf32>
    %27 = arith.mulf %26, %26 : vector<32x128xf32>
    %cst_15 = arith.constant dense<0.000000e+00> : vector<128xf32>
    %28 = vector.multi_reduction <add>, %27, %cst_15 [0] : vector<32x128xf32> to vector<128xf32>
    %29 = vector.shape_cast %28 : vector<128xf32> to vector<1x128xf32>
    %cst_16 = arith.constant 3.200000e+01 : f32
    %30 = vector.broadcast %cst_16 : f32 to vector<1x128xf32>
    %31 = arith.divf %29, %30 : vector<1x128xf32>
    %32 = vector.broadcast %24 : vector<1x128xf32> to vector<32x128xf32>
    %33 = arith.subf %20, %32 : vector<32x128xf32>
    %cst_17 = arith.constant 9.99999974E-6 : f32
    %34 = vector.broadcast %cst_17 : f32 to vector<1x128xf32>
    %35 = arith.addf %31, %34 : vector<1x128xf32>
    %36 = math.rsqrt %35 : vector<1x128xf32>
    %37 = vector.broadcast %36 : vector<1x128xf32> to vector<32x128xf32>
    %38 = arith.mulf %33, %37 : vector<32x128xf32>
    %39 = vector.broadcast %7 : vector<1x128xf32> to vector<32x128xf32>
    %40 = arith.mulf %38, %39 : vector<32x128xf32>
    %41 = vector.broadcast %8 : vector<1x128xf32> to vector<32x128xf32>
    %42 = arith.addf %40, %41 : vector<32x128xf32>
    %cst_18 = arith.constant 0.000000e+00 : f32
    %43 = vector.broadcast %cst_18 : f32 to vector<32x128xf32>
    %44 = arith.maximumf %42, %43 : vector<32x128xf32>
    %45 = vector.shape_cast %44 : vector<32x128xf32> to vector<2x16x128xf32>
    %46 = vector.shape_cast %45 : vector<2x16x128xf32> to vector<2x8x2x128xf32>
    %cst_19 = arith.constant dense<0xFF800000> : vector<2x8x128xf32>
    %47 = vector.multi_reduction <maximumf>, %46, %cst_19 [2] : vector<2x8x2x128xf32> to vector<2x8x128xf32>
    %c0_20 = arith.constant 0 : index
    %c0_21 = arith.constant 0 : index
    %c0_22 = arith.constant 0 : index
    %48 = vector.load %arg6[%c0_20, %c0_21, %c0_22] : memref<5x128x128xbf16, #tpu.memory_space<vmem>>, vector<5x128x128xbf16>
    %c0_23 = arith.constant 0 : index
    %c0_24 = arith.constant 0 : index
    %49 = vector.load %arg7[%c0_23, %c0_24] : memref<1x128xf32, #tpu.memory_space<vmem>>, vector<1x128xf32>
    %c0_25 = arith.constant 0 : index
    %c0_26 = arith.constant 0 : index
    %50 = vector.load %arg8[%c0_25, %c0_26] : memref<1x128xf32, #tpu.memory_space<vmem>>, vector<1x128xf32>
    %c0_27 = arith.constant 0 : index
    %c0_28 = arith.constant 0 : index
    %51 = vector.load %arg9[%c0_27, %c0_28] : memref<1x128xf32, #tpu.memory_space<vmem>>, vector<1x128xf32>
    %52 = vector.extract_strided_slice %47 {offsets = [0, 0, 0], sizes = [2, 4, 128], strides = [1, 1, 1]} : vector<2x8x128xf32> to vector<2x4x128xf32>
    %53 = vector.extract_strided_slice %47 {offsets = [0, 1, 0], sizes = [2, 4, 128], strides = [1, 1, 1]} : vector<2x8x128xf32> to vector<2x4x128xf32>
    %54 = vector.extract_strided_slice %47 {offsets = [0, 2, 0], sizes = [2, 4, 128], strides = [1, 1, 1]} : vector<2x8x128xf32> to vector<2x4x128xf32>
    %55 = vector.extract_strided_slice %47 {offsets = [0, 3, 0], sizes = [2, 4, 128], strides = [1, 1, 1]} : vector<2x8x128xf32> to vector<2x4x128xf32>
    %56 = vector.extract_strided_slice %47 {offsets = [0, 4, 0], sizes = [2, 4, 128], strides = [1, 1, 1]} : vector<2x8x128xf32> to vector<2x4x128xf32>
    %57 = tpu.concatenate %52, %53, %54, %55, %56 in 2 : vector<2x4x128xf32>, vector<2x4x128xf32>, vector<2x4x128xf32>, vector<2x4x128xf32>, vector<2x4x128xf32> -> vector<2x4x640xf32>
    %58 = vector.shape_cast %57 : vector<2x4x640xf32> to vector<8x640xf32>
    %59 = vector.shape_cast %48 : vector<5x128x128xbf16> to vector<640x128xbf16>
    %60 = arith.truncf %58 : vector<8x640xf32> to vector<8x640xbf16>
    %cst_29 = arith.constant dense<0.000000e+00> : vector<8x128xf32>
    %61 = tpu.matmul %60, %59, %cst_29 {dimension_numbers = #tpu.dot_dimension_numbers<[1], [0], [0], [1], [0, 0, 1, 1], [], []>} : vector<8x640xbf16>, vector<640x128xbf16>, vector<8x128xf32> -> vector<8x128xf32>
    %62 = vector.broadcast %49 : vector<1x128xf32> to vector<8x128xf32>
    %63 = arith.addf %61, %62 : vector<8x128xf32>
    %cst_30 = arith.constant dense<0.000000e+00> : vector<128xf32>
    %64 = vector.multi_reduction <add>, %63, %cst_30 [0] : vector<8x128xf32> to vector<128xf32>
    %65 = vector.shape_cast %64 : vector<128xf32> to vector<1x128xf32>
    %cst_31 = arith.constant 8.000000e+00 : f32
    %66 = vector.broadcast %cst_31 : f32 to vector<1x128xf32>
    %67 = arith.divf %65, %66 : vector<1x128xf32>
    %68 = vector.broadcast %67 : vector<1x128xf32> to vector<8x128xf32>
    %69 = arith.subf %63, %68 : vector<8x128xf32>
    %70 = arith.mulf %69, %69 : vector<8x128xf32>
    %cst_32 = arith.constant dense<0.000000e+00> : vector<128xf32>
    %71 = vector.multi_reduction <add>, %70, %cst_32 [0] : vector<8x128xf32> to vector<128xf32>
    %72 = vector.shape_cast %71 : vector<128xf32> to vector<1x128xf32>
    %cst_33 = arith.constant 8.000000e+00 : f32
    %73 = vector.broadcast %cst_33 : f32 to vector<1x128xf32>
    %74 = arith.divf %72, %73 : vector<1x128xf32>
    %75 = vector.broadcast %67 : vector<1x128xf32> to vector<8x128xf32>
    %76 = arith.subf %63, %75 : vector<8x128xf32>
    %cst_34 = arith.constant 9.99999974E-6 : f32
    %77 = vector.broadcast %cst_34 : f32 to vector<1x128xf32>
    %78 = arith.addf %74, %77 : vector<1x128xf32>
    %79 = math.rsqrt %78 : vector<1x128xf32>
    %80 = vector.broadcast %79 : vector<1x128xf32> to vector<8x128xf32>
    %81 = arith.mulf %76, %80 : vector<8x128xf32>
    %82 = vector.broadcast %50 : vector<1x128xf32> to vector<8x128xf32>
    %83 = arith.mulf %81, %82 : vector<8x128xf32>
    %84 = vector.broadcast %51 : vector<1x128xf32> to vector<8x128xf32>
    %85 = arith.addf %83, %84 : vector<8x128xf32>
    %cst_35 = arith.constant 0.000000e+00 : f32
    %86 = vector.broadcast %cst_35 : f32 to vector<8x128xf32>
    %87 = arith.maximumf %85, %86 : vector<8x128xf32>
    %88 = vector.shape_cast %87 : vector<8x128xf32> to vector<2x4x128xf32>
    %89 = vector.shape_cast %88 : vector<2x4x128xf32> to vector<2x2x2x128xf32>
    %cst_36 = arith.constant dense<0xFF800000> : vector<2x2x128xf32>
    %90 = vector.multi_reduction <maximumf>, %89, %cst_36 [2] : vector<2x2x2x128xf32> to vector<2x2x128xf32>
    %c0_37 = arith.constant 0 : index
    %c0_38 = arith.constant 0 : index
    %c0_39 = arith.constant 0 : index
    %91 = vector.load %arg10[%c0_37, %c0_38, %c0_39] : memref<2x2x128xf32, #tpu.memory_space<vmem>>, vector<2x2x128xf32>
    tpu.vector_store %arg10[%c0_37, %c0_38, %c0_39], %90 {strides = array<i32>} : memref<2x2x128xf32, #tpu.memory_space<vmem>>, vector<2x2x128xf32>,
    return
  }
}

</mosaic_0001>

<llo_original>
// kernel: tpu_custom_call.1
$region0: #{tpu_custom_call.1}
  #allocation0 [shape = 'u32[]', space=smem, size = 0x4, offset = 0x4, fixed_abs, tag = 'smem constant byte address 0x4 - core index']
  #allocation1 [shape = 'u32[144,128]{1,0:T(1,128)}', space=vmem, size = 0x12000, scoped, tag = 'internal scratch']
  %s0 = inlined_call_operand.hbm [shape: f32[40,192], index: 0, kind: input, shape index: {}]
  %s1 = inlined_call_operand.hbm [shape: bf16[192,128], index: 1, kind: input, shape index: {}]
  %s2 = inlined_call_operand.hbm [shape: bf16[5,128,128], index: 2, kind: input, shape index: {}]
  %s3 = inlined_call_operand.vmem [shape: f32[1,128], index: 3, kind: input, shape index: {}]
  %s4 = inlined_call_operand.vmem [shape: f32[1,128], index: 4, kind: input, shape index: {}]
  %s5 = inlined_call_operand.vmem [shape: f32[1,128], index: 5, kind: input, shape index: {}]
  %s6 = inlined_call_operand.hbm [shape: bf16[5,128,128], index: 6, kind: input, shape index: {}]
  %s7 = inlined_call_operand.vmem [shape: f32[1,128], index: 7, kind: input, shape index: {}]
  %s8 = inlined_call_operand.vmem [shape: f32[1,128], index: 8, kind: input, shape index: {}]
  %s9 = inlined_call_operand.vmem [shape: f32[1,128], index: 9, kind: input, shape index: {}]
  %s10 = inlined_call_operand.hbm [shape: f32[2,2,128], index: 10, kind: output, shape index: {}]
  %s11 = sld [smem:[#allocation0]]
  $region66: #{tpu_custom_call.1} parent=0
    _
  %s13 = ssub.s32 1, %s11
  %s14 = scalar_select 0, %s13, %s11
  $region1: #{tpu_custom_call.1} parent=0
    #allocation2 [shape = 'u8[40960]{0}', space=vmem, size = 0xa000, scoped, tag = 'input window, operand 0, single buffered']
    #allocation3 [shape = 's32[1]{0}', space=sflag, size = 0x4, scoped, tag = 'scoped memory for tpu_custom_call.1']
    #allocation4 [shape = 's32[1]{0}', space=sflag, size = 0x4, scoped, tag = 'scoped memory for tpu_custom_call.1']
    #allocation5 [shape = 'u8[49152]{0}', space=vmem, size = 0xc000, scoped, tag = 'input window, operand 1, single buffered']
    #allocation6 [shape = 's32[1]{0}', space=sflag, size = 0x4, scoped, tag = 'scoped memory for tpu_custom_call.1']
    #allocation7 [shape = 'u8[163840]{0}', space=vmem, size = 0x28000, scoped, tag = 'input window, operand 2, single buffered']
    #allocation8 [shape = 'u8[163840]{0}', space=vmem, size = 0x28000, scoped, tag = 'input window, operand 6, single buffered']
    #allocation9 [shape = 's32[1]{0}', space=sflag, size = 0x4, scoped, tag = 'scoped memory for tpu_custom_call.1']
    #allocation10 [shape = 'u8[2048]{0}', space=vmem, size = 0x800, scoped, tag = 'output window, operand 0, single buffered']
    %15 = vsyncpa [#allocation3], 0
    %16 = vsyncpa [#allocation6], 0
    %17 = vsyncpa [#allocation9], 0
    %18 = vsyncpa [#allocation4], 0
    // Predicated region
    $region2: #{tpu_custom_call.1} parent=1 // pred_check
      _
    $region3: #{tpu_custom_call.1} parent=1 // pred_check_branch
      %20 = sbr.rel (0) target = $region5
    $region4: #{tpu_custom_call.1} parent=1 // pred_region
      %s22 = ssub.s32 1280, 1280
      %23 = vsyncadd [#allocation3], %s22
      %s24 = sshll.u32 [#allocation2], 4
      %s25 = int_to_ptr.vmem [resolvable:$true] %s24
      %30 = dma.hbm_to_vmem [thread:$0]  %s0, 1280, %s25, [#allocation3], 256, 256, 16
    $region5: #{tpu_custom_call.1} parent=1 // pred_fallthru
      _
    // Predicated region
    $region6: #{tpu_custom_call.1} parent=1 // pred_check
      _
    $region7: #{tpu_custom_call.1} parent=1 // pred_check_branch
      %32 = sbr.rel (0) target = $region9
    $region8: #{tpu_custom_call.1} parent=1 // pred_region
      %s34 = ssub.s32 1536, 1536
      %35 = vsyncadd [#allocation6], %s34
      %s36 = sshll.u32 [#allocation5], 4
      %s37 = int_to_ptr.vmem [resolvable:$true] %s36
      %42 = dma.hbm_to_vmem [thread:$0]  %s1, 1536, %s37, [#allocation6], 64, 64, 4
    $region9: #{tpu_custom_call.1} parent=1 // pred_fallthru
      _
    // Predicated region
    $region10: #{tpu_custom_call.1} parent=1 // pred_check
      _
    $region11: #{tpu_custom_call.1} parent=1 // pred_check_branch
      %44 = sbr.rel (0) target = $region13
    $region12: #{tpu_custom_call.1} parent=1 // pred_region
      %s46 = ssub.s32 5120, 5120
      %47 = vsyncadd [#allocation6], %s46
      %s48 = sshll.u32 [#allocation7], 4
      %s49 = int_to_ptr.vmem [resolvable:$true] %s48
      %54 = dma.hbm_to_vmem [thread:$0]  %s2, 5120, %s49, [#allocation6], 64, 64, 4
    $region13: #{tpu_custom_call.1} parent=1 // pred_fallthru
      _
    // Predicated region
    $region14: #{tpu_custom_call.1} parent=1 // pred_check
      _
    $region15: #{tpu_custom_call.1} parent=1 // pred_check_branch
      %56 = sbr.rel (0) target = $region17
    $region16: #{tpu_custom_call.1} parent=1 // pred_region
      _
    $region17: #{tpu_custom_call.1} parent=1 // pred_fallthru
      _
    // Predicated region
    $region18: #{tpu_custom_call.1} parent=1 // pred_check
      _
    $region19: #{tpu_custom_call.1} parent=1 // pred_check_branch
      %58 = sbr.rel (0) target = $region21
    $region20: #{tpu_custom_call.1} parent=1 // pred_region
      _
    $region21: #{tpu_custom_call.1} parent=1 // pred_fallthru
      _
    // Predicated region
    $region22: #{tpu_custom_call.1} parent=1 // pred_check
      _
    $region23: #{tpu_custom_call.1} parent=1 // pred_check_branch
      %60 = sbr.rel (0) target = $region25
    $region24: #{tpu_custom_call.1} parent=1 // pred_region
      _
    $region25: #{tpu_custom_call.1} parent=1 // pred_fallthru
      _
    // Predicated region
    $region26: #{tpu_custom_call.1} parent=1 // pred_check
      _
    $region27: #{tpu_custom_call.1} parent=1 // pred_check_branch
      %62 = sbr.rel (0) target = $region29
    $region28: #{tpu_custom_call.1} parent=1 // pred_region
      %s64 = ssub.s32 5120, 5120
      %65 = vsyncadd [#allocation9], %s64
      %s66 = sshll.u32 [#allocation8], 4
      %s67 = int_to_ptr.vmem [resolvable:$true] %s66
      %72 = dma.hbm_to_vmem [thread:$0]  %s6, 5120, %s67, [#allocation9], 64, 64, 4
    $region29: #{tpu_custom_call.1} parent=1 // pred_fallthru
      _
    // Predicated region
    $region30: #{tpu_custom_call.1} parent=1 // pred_check
      _
    $region31: #{tpu_custom_call.1} parent=1 // pred_check_branch
      %74 = sbr.rel (0) target = $region33
    $region32: #{tpu_custom_call.1} parent=1 // pred_region
      _
    $region33: #{tpu_custom_call.1} parent=1 // pred_fallthru
      _
    // Predicated region
    $region34: #{tpu_custom_call.1} parent=1 // pred_check
      _
    $region35: #{tpu_custom_call.1} parent=1 // pred_check_branch
      %76 = sbr.rel (0) target = $region37
    $region36: #{tpu_custom_call.1} parent=1 // pred_region
      _
    $region37: #{tpu_custom_call.1} parent=1 // pred_fallthru
      _
    // Predicated region
    $region38: #{tpu_custom_call.1} parent=1 // pred_check
      _
    $region39: #{tpu_custom_call.1} parent=1 // pred_check_branch
      %78 = sbr.rel (0) target = $region41
    $region40: #{tpu_custom_call.1} parent=1 // pred_region
      _
    $region41: #{tpu_custom_call.1} parent=1 // pred_fallthru
      _
    // Predicated region
    $region42: #{tpu_custom_call.1} parent=1 // pred_check
      _
    $region43: #{tpu_custom_call.1} parent=1 // pred_check_branch
      %80 = sbr.rel (0) target = $region45
    $region44: #{tpu_custom_call.1} parent=1 // pred_region
      %81 = dma.done [#allocation3], 1280
    $region45: #{tpu_custom_call.1} parent=1 // pred_fallthru
      _
    // Predicated region
    $region46: #{tpu_custom_call.1} parent=1 // pred_check
      _
    $region47: #{tpu_custom_call.1} parent=1 // pred_check_branch
      %83 = sbr.rel (0) target = $region49
    $region48: #{tpu_custom_call.1} parent=1 // pred_region
      %84 = dma.done [#allocation6], 1536
    $region49: #{tpu_custom_call.1} parent=1 // pred_fallthru
      _
    // Predicated region
    $region50: #{tpu_custom_call.1} parent=1 // pred_check
      _
    $region51: #{tpu_custom_call.1} parent=1 // pred_check_branch
      %86 = sbr.rel (0) target = $region53
    $region52: #{tpu_custom_call.1} parent=1 // pred_region
      %87 = dma.done [#allocation6], 5120
    $region53: #{tpu_custom_call.1} parent=1 // pred_fallthru
      _
    // Predicated region
    $region54: #{tpu_custom_call.1} parent=1 // pred_check
      _
    $region55: #{tpu_custom_call.1} parent=1 // pred_check_branch
      %89 = sbr.rel (0) target = $region57
    $region56: #{tpu_custom_call.1} parent=1 // pred_region
      %90 = dma.done [#allocation9], 5120
    $region57: #{tpu_custom_call.1} parent=1 // pred_fallthru
      _
    %v92 = vld [vmem:[#allocation2] sm:$0xff]
    %v93 = vld [vmem:[#allocation2 + $0x8] sm:$0xff]
    %v94 = vld [vmem:[#allocation2 + $0x10] sm:$0xff]
    %v95 = vld [vmem:[#allocation2 + $0x18] sm:$0xff]
    %v96 = vld [vmem:[#allocation2 + $0x20] sm:$0xff]
    %v97 = vld [vmem:[#allocation2 + $0x28] sm:$0xff]
    %v98 = vld [vmem:[#allocation2 + $0x30] sm:$0xff]
    %v99 = vld [vmem:[#allocation2 + $0x38] sm:$0xff]
    %v100 = vld [vmem:[#allocation2 + $0x40] sm:$0xff]
    %v101 = vld [vmem:[#allocation2 + $0x48] sm:$0xff]
    %v102 = vld [vmem:[#allocation5] sm:$0xf]
    %v103 = vld [vmem:[#allocation5 + $0x4] sm:$0xf]
    %v104 = vld [vmem:[#allocation5 + $0x8] sm:$0xf]
    %v105 = vld [vmem:[#allocation5 + $0xc] sm:$0xf]
    %v106 = vld [vmem:[#allocation5 + $0x10] sm:$0xf]
    %v107 = vld [vmem:[#allocation5 + $0x14] sm:$0xf]
    %v108 = vld [vmem:[#allocation5 + $0x18] sm:$0xf]
    %v109 = vld [vmem:[#allocation5 + $0x1c] sm:$0xf]
    %v110 = vld [vmem:[#allocation5 + $0x20] sm:$0xf]
    %v111 = vld [vmem:[#allocation5 + $0x24] sm:$0xf]
    %v112 = vld [vmem:[#allocation5 + $0x28] sm:$0xf]
    %v113 = vld [vmem:[#allocation5 + $0x2c] sm:$0xf]
    %v114 = vld [vmem:[#allocation5 + $0x30] sm:$0xf]
    %v115 = vld [vmem:[#allocation5 + $0x34] sm:$0xf]
    %v116 = vld [vmem:[#allocation5 + $0x38] sm:$0xf]
    %v117 = vld [vmem:[#allocation5 + $0x3c] sm:$0xf]
    %v118 = vld [vmem:[#allocation5 + $0x40] sm:$0xf]
    %v119 = vld [vmem:[#allocation5 + $0x44] sm:$0xf]
    %v120 = vld [vmem:[#allocation5 + $0x48] sm:$0xf]
    %v121 = vld [vmem:[#allocation5 + $0x4c] sm:$0xf]
    %v122 = vld [vmem:[#allocation5 + $0x50] sm:$0xf]
    %v123 = vld [vmem:[#allocation5 + $0x54] sm:$0xf]
    %v124 = vld [vmem:[#allocation5 + $0x58] sm:$0xf]
    %v125 = vld [vmem:[#allocation5 + $0x5c] sm:$0xf]
    %v126 = vpack.c.bf16 %v94, %v92
    %v127 = vpack.c.bf16 %v95, %v93
    %v128 = vpack.c.bf16 %v98, %v96
    %v129 = vpack.c.bf16 %v99, %v97
    %v130 = vpack.c.bf16 %v100, %v100
    %v131 = vpack.c.bf16 %v101, %v101
    %v156 = vunpack.c.l.b16 %v102
    %v157 = vunpack.c.l.b16 %v103
    %v158 = vunpack.c.l.b16 %v104
    %v159 = vunpack.c.l.b16 %v105
    %v160 = vunpack.c.l.b16 %v106
    %v161 = vunpack.c.l.b16 %v107
    %v162 = vunpack.c.l.b16 %v108
    %v163 = vunpack.c.l.b16 %v109
    %v164 = vunpack.c.l.b16 %v110
    %v165 = vunpack.c.l.b16 %v111
    %v166 = vunpack.c.l.b16 %v112
    %v167 = vunpack.c.l.b16 %v113
    %v168 = vunpack.c.l.b16 %v114
    %v169 = vunpack.c.l.b16 %v115
    %v170 = vunpack.c.l.b16 %v116
    %v171 = vunpack.c.l.b16 %v117
    %v172 = vunpack.c.l.b16 %v118
    %v173 = vunpack.c.l.b16 %v119
    %v174 = vunpack.c.l.b16 %v120
    %v175 = vunpack.c.l.b16 %v121
    %v176 = vunpack.c.l.b16 %v122
    %v177 = vunpack.c.l.b16 %v123
    %v178 = vunpack.c.l.b16 %v124
    %v179 = vunpack.c.l.b16 %v125
    %v180 = vpack.c.b16 %v157, %v156
    %v181 = vpack.c.b16 %v159, %v158
    %v182 = vpack.c.b16 %v161, %v160
    %v183 = vpack.c.b16 %v163, %v162
    %v184 = vpack.c.b16 %v165, %v164
    %v185 = vpack.c.b16 %v167, %v166
    %v186 = vpack.c.b16 %v169, %v168
    %v187 = vpack.c.b16 %v171, %v170
    %v188 = vpack.c.b16 %v173, %v172
    %v189 = vpack.c.b16 %v175, %v174
    %v190 = vpack.c.b16 %v177, %v176
    %v191 = vpack.c.b16 %v179, %v178
    %vm204 = vcmask 523264
    %v206 = vsel %vm204, %v127, 0
    %v209 = vsel %vm204, %v129, 0
    %v212 = vsel %vm204, %v131, 0
    %214 = vmatprep.subr.bf16.mxu0 0
    %215 = vmatpush1.bf16.msra.mxu0 %v180
    %216 = vmatprep.subr.bf16.mxu0 0
    %217 = vmatpush1.bf16.msra.mxu0 %v181
    %218 = vmatprep.subr.bf16.mxu0 0
    %219 = vmatpush1.bf16.msra.mxu0 %v182
    %220 = vmatprep.subr.bf16.mxu0 0
    %221 = vmatpush1.bf16.msra.mxu0 %v183
    %222 = vmatprep.subr.bf16.mxu0 0
    %223 = vmatpush1.bf16.msra.mxu0 %v184
    %224 = vmatprep.subr.bf16.mxu0 0
    %225 = vmatpush1.bf16.msra.mxu0 %v185
    %226 = vmatprep.subr.bf16.mxu0 0
    %227 = vmatpush1.bf16.msra.mxu0 %v186
    %228 = vmatprep.subr.bf16.mxu0 0
    %229 = vmatpush1.bf16.msra.mxu0 %v187
    %230 = vmatprep.subr.bf16.mxu0 0
    %231 = vmatpush1.bf16.msra.mxu0 %v188
    %232 = vmatprep.subr.bf16.mxu0 0
    %233 = vmatpush1.bf16.msra.mxu0 %v189
    %234 = vmatprep.subr.bf16.mxu0 0
    %235 = vmatpush1.bf16.msra.mxu0 %v190
    %236 = vmatprep.subr.bf16.mxu0 0
    %237 = vmatpush1.bf16.msra.mxu0 %v191
    %238 = vmatprep.subr.bf16.mxu0 0
    %239 = vmatpush1.bf16.msra.mxu0 0
    %240 = vmatprep.subr.bf16.mxu0 0
    %241 = vmatpush1.bf16.msra.mxu0 0
    %242 = vmatprep.subr.bf16.mxu0 0
    %243 = vmatpush1.bf16.msra.mxu0 0
    %244 = vmatprep.subr.bf16.mxu0 0
    %245 = vmatpush1.bf16.msra.mxu0 0
    %246 = vmatprep.mubr.bf16.mxu0 %v206
    %247 = vmatmul.mubr.bf16.gmra.mrb[0].mxu0 %v126
    %v248 = vpop.f32.mrb[0].mxu0
    %v249 = vadd.f32 0.0, %v248
    %v250 = vpop.f32.mrb[0].mxu0
    %v251 = vpop.f32.mrb[0].mxu0
    %v252 = vadd.f32 0.0, %v251
    %v253 = vpop.f32.mrb[0].mxu0
    %254 = vmatprep.mubr.bf16.mxu0 %v209
    %255 = vmatmul.mubr.bf16.gmra.mrb[0].mxu0 %v128
    %v256 = vpop.f32.mrb[0].mxu0
    %v257 = vadd.f32 0.0, %v256
    %v258 = vpop.f32.mrb[0].mxu0
    %v259 = vpop.f32.mrb[0].mxu0
    %v260 = vadd.f32 0.0, %v259
    %v261 = vpop.f32.mrb[0].mxu0
    %262 = vmatprep.mubr.bf16.mxu0 %v212
    %263 = vmatmul.mubr.bf16.gmra.mrb[0].mxu0 %v130
    %v264 = vpop.f32.mrb[0].mxu0
    %v265 = vadd.f32 0.0, %v264
    %v266 = vpop.f32.mrb[0].mxu0
    %v267 = vpop.f32.mrb[0].mxu0
    %v268 = vpop.f32.mrb[0].mxu0
    %269 = vdwg.mxu0
    %v275 = vcombine.high %v249, %v249
    %v276 = vcombine.high %v252, %v252
    %v277 = vcombine.high %v257, %v257
    %v278 = vcombine.high %v260, %v260
    %v279 = vcombine.high %v265, %v265
    %v280 = vld [vmem:[#allocation7] sm:$0xf]
    %v281 = vld [vmem:[#allocation7 + $0x4] sm:$0xf]
    %v282 = vld [vmem:[#allocation7 + $0x8] sm:$0xf]
    %v283 = vld [vmem:[#allocation7 + $0xc] sm:$0xf]
    %v284 = vld [vmem:[#allocation7 + $0x10] sm:$0xf]
    %v285 = vld [vmem:[#allocation7 + $0x14] sm:$0xf]
    %v286 = vld [vmem:[#allocation7 + $0x18] sm:$0xf]
    %v287 = vld [vmem:[#allocation7 + $0x1c] sm:$0xf]
    %v288 = vld [vmem:[#allocation7 + $0x20] sm:$0xf]
    %v289 = vld [vmem:[#allocation7 + $0x24] sm:$0xf]
    %v290 = vld [vmem:[#allocation7 + $0x28] sm:$0xf]
    %v291 = vld [vmem:[#allocation7 + $0x2c] sm:$0xf]
    %v292 = vld [vmem:[#allocation7 + $0x30] sm:$0xf]
    %v293 = vld [vmem:[#allocation7 + $0x34] sm:$0xf]
    %v294 = vld [vmem:[#allocation7 + $0x38] sm:$0xf]
    %v295 = vld [vmem:[#allocation7 + $0x3c] sm:$0xf]
    %v296 = vld [vmem:[#allocation7 + $0x40] sm:$0xf]
    %v297 = vld [vmem:[#allocation7 + $0x44] sm:$0xf]
    %v298 = vld [vmem:[#allocation7 + $0x48] sm:$0xf]
    %v299 = vld [vmem:[#allocation7 + $0x4c] sm:$0xf]
    %v300 = vld [vmem:[#allocation7 + $0x50] sm:$0xf]
    %v301 = vld [vmem:[#allocation7 + $0x54] sm:$0xf]
    %v302 = vld [vmem:[#allocation7 + $0x58] sm:$0xf]
    %v303 = vld [vmem:[#allocation7 + $0x5c] sm:$0xf]
    %v304 = vld [vmem:[#allocation7 + $0x60] sm:$0xf]
    %v305 = vld [vmem:[#allocation7 + $0x64] sm:$0xf]
    %v306 = vld [vmem:[#allocation7 + $0x68] sm:$0xf]
    %v307 = vld [vmem:[#allocation7 + $0x6c] sm:$0xf]
    %v308 = vld [vmem:[#allocation7 + $0x70] sm:$0xf]
    %v309 = vld [vmem:[#allocation7 + $0x74] sm:$0xf]
    %v310 = vld [vmem:[#allocation7 + $0x78] sm:$0xf]
    %v311 = vld [vmem:[#allocation7 + $0x7c] sm:$0xf]
    %v312 = vld [vmem:[#allocation7 + $0x80] sm:$0xf]
    %v313 = vld [vmem:[#allocation7 + $0x84] sm:$0xf]
    %v314 = vld [vmem:[#allocation7 + $0x88] sm:$0xf]
    %v315 = vld [vmem:[#allocation7 + $0x8c] sm:$0xf]
    %v316 = vld [vmem:[#allocation7 + $0x90] sm:$0xf]
    %v317 = vld [vmem:[#allocation7 + $0x94] sm:$0xf]
    %v318 = vld [vmem:[#allocation7 + $0x98] sm:$0xf]
    %v319 = vld [vmem:[#allocation7 + $0x9c] sm:$0xf]
    %v320 = vld [vmem:[#allocation7 + $0xa0] sm:$0xf]
    %v321 = vld [vmem:[#allocation7 + $0xa4] sm:$0xf]
    %v322 = vld [vmem:[#allocation7 + $0xa8] sm:$0xf]
    %v323 = vld [vmem:[#allocation7 + $0xac] sm:$0xf]
    %v324 = vld [vmem:[#allocation7 + $0xb0] sm:$0xf]
    %v325 = vld [vmem:[#allocation7 + $0xb4] sm:$0xf]
    %v326 = vld [vmem:[#allocation7 + $0xb8] sm:$0xf]
    %v327 = vld [vmem:[#allocation7 + $0xbc] sm:$0xf]
    %v328 = vld [vmem:[#allocation7 + $0xc0] sm:$0xf]
    %v329 = vld [vmem:[#allocation7 + $0xc4] sm:$0xf]
    %v330 = vld [vmem:[#allocation7 + $0xc8] sm:$0xf]
    %v331 = vld [vmem:[#allocation7 + $0xcc] sm:$0xf]
    %v332 = vld [vmem:[#allocation7 + $0xd0] sm:$0xf]
    %v333 = vld [vmem:[#allocation7 + $0xd4] sm:$0xf]
    %v334 = vld [vmem:[#allocation7 + $0xd8] sm:$0xf]
    %v335 = vld [vmem:[#allocation7 + $0xdc] sm:$0xf]
    %v336 = vld [vmem:[#allocation7 + $0xe0] sm:$0xf]
    %v337 = vld [vmem:[#allocation7 + $0xe4] sm:$0xf]
    %v338 = vld [vmem:[#allocation7 + $0xe8] sm:$0xf]
    %v339 = vld [vmem:[#allocation7 + $0xec] sm:$0xf]
    %v340 = vld [vmem:[#allocation7 + $0xf0] sm:$0xf]
    %v341 = vld [vmem:[#allocation7 + $0xf4] sm:$0xf]
    %v342 = vld [vmem:[#allocation7 + $0xf8] sm:$0xf]
    %v343 = vld [vmem:[#allocation7 + $0xfc] sm:$0xf]
    %v344 = vld [vmem:[#allocation7 + $0x100] sm:$0xf]
    %v345 = vld [vmem:[#allocation7 + $0x104] sm:$0xf]
    %v346 = vld [vmem:[#allocation7 + $0x108] sm:$0xf]
    %v347 = vld [vmem:[#allocation7 + $0x10c] sm:$0xf]
    %v348 = vld [vmem:[#allocation7 + $0x110] sm:$0xf]
    %v349 = vld [vmem:[#allocation7 + $0x114] sm:$0xf]
    %v350 = vld [vmem:[#allocation7 + $0x118] sm:$0xf]
    %v351 = vld [vmem:[#allocation7 + $0x11c] sm:$0xf]
    %v352 = vld [vmem:[#allocation7 + $0x120] sm:$0xf]
    %v353 = vld [vmem:[#allocation7 + $0x124] sm:$0xf]
    %v354 = vld [vmem:[#allocation7 + $0x128] sm:$0xf]
    %v355 = vld [vmem:[#allocation7 + $0x12c] sm:$0xf]
    %v356 = vld [vmem:[#allocation7 + $0x130] sm:$0xf]
    %v357 = vld [vmem:[#allocation7 + $0x134] sm:$0xf]
    %v358 = vld [vmem:[#allocation7 + $0x138] sm:$0xf]
    %v359 = vld [vmem:[#allocation7 + $0x13c] sm:$0xf]
    %v360 = vld [vmem:[%s3] sm:$0x1]
    %v361 = vld [vmem:[%s4] sm:$0x1]
    %v362 = vld [vmem:[%s5] sm:$0x1]
    %v363 = vcombine.low %v249, %v275
    %v364 = vcombine.low %v252, %v276
    %v365 = vcombine.low %v277, %v260
    %v366 = vcombine.low %v278, %v265
    %vm371 = vcmask 1046528
    %v372 = vrot.slane %v363, 1
    %v373 = vrot.slane %v364, 1
    %v374 = vsel %vm371, %v372, %v373
    %v375 = vrot.slane %v257, 1
    %v376 = vsel %vm371, %v373, %v375
    %v377 = vrot.slane %v365, 1
    %v378 = vrot.slane %v366, 1
    %v379 = vsel %vm371, %v377, %v378
    %v380 = vrot.slane %v279, 1
    %v381 = vsel %vm371, %v378, %v380
    %vm386 = vcmask 1045504
    %v387 = vrot.slane %v363, 2
    %v388 = vrot.slane %v364, 2
    %v389 = vsel %vm386, %v387, %v388
    %v390 = vrot.slane %v257, 2
    %v391 = vsel %vm386, %v388, %v390
    %v392 = vrot.slane %v365, 2
    %v393 = vrot.slane %v366, 2
    %v394 = vsel %vm386, %v392, %v393
    %v395 = vrot.slane %v279, 2
    %v396 = vsel %vm386, %v393, %v395
    %vm401 = vcmask 1044480
    %v402 = vrot.slane %v363, 3
    %v403 = vrot.slane %v364, 3
    %v404 = vsel %vm401, %v402, %v403
    %v405 = vrot.slane %v257, 3
    %v406 = vsel %vm401, %v403, %v405
    %v407 = vrot.slane %v365, 3
    %v408 = vrot.slane %v366, 3
    %v409 = vsel %vm401, %v407, %v408
    %v410 = vrot.slane %v279, 3
    %v411 = vsel %vm401, %v408, %v410
    %v416 = vcombine.low %v275, %v252
    %v417 = vcombine.low %v276, %v257
    %v418 = vcombine.low %v260, %v278
    %v419 = vcombine.low %v265, %v279
    %v424 = vpack.c.bf16 %v364, %v363
    %v425 = vpack.c.bf16 %v376, %v374
    %v426 = vpack.c.bf16 %v391, %v389
    %v427 = vpack.c.bf16 %v406, %v404
    %v428 = vpack.c.bf16 %v417, %v416
    %v429 = vpack.c.bf16 %v366, %v365
    %v430 = vpack.c.bf16 %v381, %v379
    %v431 = vpack.c.bf16 %v396, %v394
    %v432 = vpack.c.bf16 %v411, %v409
    %v433 = vpack.c.bf16 %v419, %v418
    %v435 = vlaneseq
    %v436 = vshrl.u32 %v435, 7
    %v437 = vsub.s32 0, %v436
    %v438 = vrot.slane %v360, %v437
    %v520 = vunpack.c.l.b16 %v280
    %v521 = vunpack.c.l.b16 %v281
    %v522 = vunpack.c.l.b16 %v282
    %v523 = vunpack.c.l.b16 %v283
    %v524 = vunpack.c.l.b16 %v284
    %v525 = vunpack.c.l.b16 %v285
    %v526 = vunpack.c.l.b16 %v286
    %v527 = vunpack.c.l.b16 %v287
    %v528 = vunpack.c.l.b16 %v288
    %v529 = vunpack.c.l.b16 %v289
    %v530 = vunpack.c.l.b16 %v290
    %v531 = vunpack.c.l.b16 %v291
    %v532 = vunpack.c.l.b16 %v292
    %v533 = vunpack.c.l.b16 %v293
    %v534 = vunpack.c.l.b16 %v294
    %v535 = vunpack.c.l.b16 %v295
    %v536 = vunpack.c.l.b16 %v296
    %v537 = vunpack.c.l.b16 %v297
    %v538 = vunpack.c.l.b16 %v298
    %v539 = vunpack.c.l.b16 %v299
    %v540 = vunpack.c.l.b16 %v300
    %v541 = vunpack.c.l.b16 %v301
    %v542 = vunpack.c.l.b16 %v302
    %v543 = vunpack.c.l.b16 %v303
    %v544 = vunpack.c.l.b16 %v304
    %v545 = vunpack.c.l.b16 %v305
    %v546 = vunpack.c.l.b16 %v306
    %v547 = vunpack.c.l.b16 %v307
    %v548 = vunpack.c.l.b16 %v308
    %v549 = vunpack.c.l.b16 %v309
    %v550 = vunpack.c.l.b16 %v310
    %v551 = vunpack.c.l.b16 %v311
    %v552 = vunpack.c.l.b16 %v312
    %v553 = vunpack.c.l.b16 %v313
    %v554 = vunpack.c.l.b16 %v314
    %v555 = vunpack.c.l.b16 %v315
    %v556 = vunpack.c.l.b16 %v316
    %v557 = vunpack.c.l.b16 %v317
    %v558 = vunpack.c.l.b16 %v318
    %v559 = vunpack.c.l.b16 %v319
    %v560 = vunpack.c.l.b16 %v320
    %v561 = vunpack.c.l.b16 %v321
    %v562 = vunpack.c.l.b16 %v322
    %v563 = vunpack.c.l.b16 %v323
    %v564 = vunpack.c.l.b16 %v324
    %v565 = vunpack.c.l.b16 %v325
    %v566 = vunpack.c.l.b16 %v326
    %v567 = vunpack.c.l.b16 %v327
    %v568 = vunpack.c.l.b16 %v328
    %v569 = vunpack.c.l.b16 %v329
    %v570 = vunpack.c.l.b16 %v330
    %v571 = vunpack.c.l.b16 %v331
    %v572 = vunpack.c.l.b16 %v332
    %v573 = vunpack.c.l.b16 %v333
    %v574 = vunpack.c.l.b16 %v334
    %v575 = vunpack.c.l.b16 %v335
    %v576 = vunpack.c.l.b16 %v336
    %v577 = vunpack.c.l.b16 %v337
    %v578 = vunpack.c.l.b16 %v338
    %v579 = vunpack.c.l.b16 %v339
    %v580 = vunpack.c.l.b16 %v340
    %v581 = vunpack.c.l.b16 %v341
    %v582 = vunpack.c.l.b16 %v342
    %v583 = vunpack.c.l.b16 %v343
    %v584 = vunpack.c.l.b16 %v344
    %v585 = vunpack.c.l.b16 %v345
    %v586 = vunpack.c.l.b16 %v346
    %v587 = vunpack.c.l.b16 %v347
    %v588 = vunpack.c.l.b16 %v348
    %v589 = vunpack.c.l.b16 %v349
    %v590 = vunpack.c.l.b16 %v350
    %v591 = vunpack.c.l.b16 %v351
    %v592 = vunpack.c.l.b16 %v352
    %v593 = vunpack.c.l.b16 %v353
    %v594 = vunpack.c.l.b16 %v354
    %v595 = vunpack.c.l.b16 %v355
    %v596 = vunpack.c.l.b16 %v356
    %v597 = vunpack.c.l.b16 %v357
    %v598 = vunpack.c.l.b16 %v358
    %v599 = vunpack.c.l.b16 %v359
    %v600 = vpack.c.b16 %v521, %v520
    %v601 = vpack.c.b16 %v523, %v522
    %v602 = vpack.c.b16 %v525, %v524
    %v603 = vpack.c.b16 %v527, %v526
    %v604 = vpack.c.b16 %v529, %v528
    %v605 = vpack.c.b16 %v531, %v530
    %v606 = vpack.c.b16 %v533, %v532
    %v607 = vpack.c.b16 %v535, %v534
    %v608 = vpack.c.b16 %v537, %v536
    %v609 = vpack.c.b16 %v539, %v538
    %v610 = vpack.c.b16 %v541, %v540
    %v611 = vpack.c.b16 %v543, %v542
    %v612 = vpack.c.b16 %v545, %v544
    %v613 = vpack.c.b16 %v547, %v546
    %v614 = vpack.c.b16 %v549, %v548
    %v615 = vpack.c.b16 %v551, %v550
    %v616 = vpack.c.b16 %v553, %v552
    %v617 = vpack.c.b16 %v555, %v554
    %v618 = vpack.c.b16 %v557, %v556
    %v619 = vpack.c.b16 %v559, %v558
    %v620 = vpack.c.b16 %v561, %v560
    %v621 = vpack.c.b16 %v563, %v562
    %v622 = vpack.c.b16 %v565, %v564
    %v623 = vpack.c.b16 %v567, %v566
    %v624 = vpack.c.b16 %v569, %v568
    %v625 = vpack.c.b16 %v571, %v570
    %v626 = vpack.c.b16 %v573, %v572
    %v627 = vpack.c.b16 %v575, %v574
    %v628 = vpack.c.b16 %v577, %v576
    %v629 = vpack.c.b16 %v579, %v578
    %v630 = vpack.c.b16 %v581, %v580
    %v631 = vpack.c.b16 %v583, %v582
    %v632 = vpack.c.b16 %v585, %v584
    %v633 = vpack.c.b16 %v587, %v586
    %v634 = vpack.c.b16 %v589, %v588
    %v635 = vpack.c.b16 %v591, %v590
    %v636 = vpack.c.b16 %v593, %v592
    %v637 = vpack.c.b16 %v595, %v594
    %v638 = vpack.c.b16 %v597, %v596
    %v639 = vpack.c.b16 %v599, %v598
    %680 = vmatprep.subr.bf16.mxu0 0
    %681 = vmatpush1.bf16.msra.mxu0 %v600
    %682 = vmatprep.subr.bf16.mxu0 0
    %683 = vmatpush1.bf16.msra.mxu0 %v601
    %684 = vmatprep.subr.bf16.mxu0 0
    %685 = vmatpush1.bf16.msra.mxu0 %v602
    %686 = vmatprep.subr.bf16.mxu0 0
    %687 = vmatpush1.bf16.msra.mxu0 %v603
    %688 = vmatprep.subr.bf16.mxu0 0
    %689 = vmatpush1.bf16.msra.mxu0 %v604
    %690 = vmatprep.subr.bf16.mxu0 0
    %691 = vmatpush1.bf16.msra.mxu0 %v605
    %692 = vmatprep.subr.bf16.mxu0 0
    %693 = vmatpush1.bf16.msra.mxu0 %v606
    %694 = vmatprep.subr.bf16.mxu0 0
    %695 = vmatpush1.bf16.msra.mxu0 %v607
    %696 = vmatprep.subr.bf16.mxu0 0
    %697 = vmatpush1.bf16.msra.mxu0 %v608
    %698 = vmatprep.subr.bf16.mxu0 0
    %699 = vmatpush1.bf16.msra.mxu0 %v609
    %700 = vmatprep.subr.bf16.mxu0 0
    %701 = vmatpush1.bf16.msra.mxu0 %v610
    %702 = vmatprep.subr.bf16.mxu0 0
    %703 = vmatpush1.bf16.msra.mxu0 %v611
    %704 = vmatprep.subr.bf16.mxu0 0
    %705 = vmatpush1.bf16.msra.mxu0 %v612
    %706 = vmatprep.subr.bf16.mxu0 0
    %707 = vmatpush1.bf16.msra.mxu0 %v613
    %708 = vmatprep.subr.bf16.mxu0 0
    %709 = vmatpush1.bf16.msra.mxu0 %v614
    %710 = vmatprep.subr.bf16.mxu0 0
    %711 = vmatpush1.bf16.msra.mxu0 %v615
    %712 = vmatprep.mubr.bf16.mxu0 %v425
    %713 = vmatmul.mubr.bf16.gmra.mrb[0].mxu0 %v424
    %v714 = vpop.f32.mrb[0].mxu0
    %v715 = vadd.f32 %v438, %v714
    %v716 = vpop.f32.mrb[0].mxu0
    %v717 = vpop.f32.mrb[0].mxu0
    %v718 = vadd.f32 %v438, %v717
    %v719 = vpop.f32.mrb[0].mxu0
    %720 = vmatprep.mubr.bf16.mxu0 %v430
    %721 = vmatmul.mubr.bf16.gmra.mrb[0].mxu0 %v429
    %v722 = vpop.f32.mrb[0].mxu0
    %v723 = vadd.f32 %v438, %v722
    %v724 = vpop.f32.mrb[0].mxu0
    %v725 = vpop.f32.mrb[0].mxu0
    %v726 = vadd.f32 %v438, %v725
    %v727 = vpop.f32.mrb[0].mxu0
    %728 = vdwg.mxu0
    %729 = vmatprep.subr.bf16.mxu0 0
    %730 = vmatpush1.bf16.msra.mxu0 %v616
    %731 = vmatprep.subr.bf16.mxu0 0
    %732 = vmatpush1.bf16.msra.mxu0 %v617
    %733 = vmatprep.subr.bf16.mxu0 0
    %734 = vmatpush1.bf16.msra.mxu0 %v618
    %735 = vmatprep.subr.bf16.mxu0 0
    %736 = vmatpush1.bf16.msra.mxu0 %v619
    %737 = vmatprep.subr.bf16.mxu0 0
    %738 = vmatpush1.bf16.msra.mxu0 %v620
    %739 = vmatprep.subr.bf16.mxu0 0
    %740 = vmatpush1.bf16.msra.mxu0 %v621
    %741 = vmatprep.subr.bf16.mxu0 0
    %742 = vmatpush1.bf16.msra.mxu0 %v622
    %743 = vmatprep.subr.bf16.mxu0 0
    %744 = vmatpush1.bf16.msra.mxu0 %v623
    %745 = vmatprep.subr.bf16.mxu0 0
    %746 = vmatpush1.bf16.msra.mxu0 %v624
    %747 = vmatprep.subr.bf16.mxu0 0
    %748 = vmatpush1.bf16.msra.mxu0 %v625
    %749 = vmatprep.subr.bf16.mxu0 0
    %750 = vmatpush1.bf16.msra.mxu0 %v626
    %751 = vmatprep.subr.bf16.mxu0 0
    %752 = vmatpush1.bf16.msra.mxu0 %v627
    %753 = vmatprep.subr.bf16.mxu0 0
    %754 = vmatpush1.bf16.msra.mxu0 %v628
    %755 = vmatprep.subr.bf16.mxu0 0
    %756 = vmatpush1.bf16.msra.mxu0 %v629
    %757 = vmatprep.subr.bf16.mxu0 0
    %758 = vmatpush1.bf16.msra.mxu0 %v630
    %759 = vmatprep.subr.bf16.mxu0 0
    %760 = vmatpush1.bf16.msra.mxu0 %v631
    %761 = vmatprep.mubr.bf16.mxu0 %v427
    %762 = vmatmul.mubr.bf16.gmra.mrb[0].mxu0 %v426
    %v763 = vpop.f32.mrb[0].mxu0
    %v764 = vadd.f32 %v715, %v763
    %v765 = vpop.f32.mrb[0].mxu0
    %v766 = vpop.f32.mrb[0].mxu0
    %v767 = vadd.f32 %v718, %v766
    %v768 = vpop.f32.mrb[0].mxu0
    %769 = vmatprep.mubr.bf16.mxu0 %v432
    %770 = vmatmul.mubr.bf16.gmra.mrb[0].mxu0 %v431
    %v771 = vpop.f32.mrb[0].mxu0
    %v772 = vadd.f32 %v723, %v771
    %v773 = vpop.f32.mrb[0].mxu0
    %v774 = vpop.f32.mrb[0].mxu0
    %v775 = vadd.f32 %v726, %v774
    %v776 = vpop.f32.mrb[0].mxu0
    %777 = vdwg.mxu0
    %778 = vmatprep.subr.bf16.mxu0 0
    %779 = vmatpush1.bf16.msra.mxu0 %v632
    %780 = vmatprep.subr.bf16.mxu0 0
    %781 = vmatpush1.bf16.msra.mxu0 %v633
    %782 = vmatprep.subr.bf16.mxu0 0
    %783 = vmatpush1.bf16.msra.mxu0 %v634
    %784 = vmatprep.subr.bf16.mxu0 0
    %785 = vmatpush1.bf16.msra.mxu0 %v635
    %786 = vmatprep.subr.bf16.mxu0 0
    %787 = vmatpush1.bf16.msra.mxu0 %v636
    %788 = vmatprep.subr.bf16.mxu0 0
    %789 = vmatpush1.bf16.msra.mxu0 %v637
    %790 = vmatprep.subr.bf16.mxu0 0
    %791 = vmatpush1.bf16.msra.mxu0 %v638
    %792 = vmatprep.subr.bf16.mxu0 0
    %793 = vmatpush1.bf16.msra.mxu0 %v639
    %794 = vmatprep.subr.bf16.mxu0 0
    %795 = vmatpush1.bf16.msra.mxu0 0
    %796 = vmatprep.subr.bf16.mxu0 0
    %797 = vmatpush1.bf16.msra.mxu0 0
    %798 = vmatprep.subr.bf16.mxu0 0
    %799 = vmatpush1.bf16.msra.mxu0 0
    %800 = vmatprep.subr.bf16.mxu0 0
    %801 = vmatpush1.bf16.msra.mxu0 0
    %802 = vmatprep.subr.bf16.mxu0 0
    %803 = vmatpush1.bf16.msra.mxu0 0
    %804 = vmatprep.subr.bf16.mxu0 0
    %805 = vmatpush1.bf16.msra.mxu0 0
    %806 = vmatprep.subr.bf16.mxu0 0
    %807 = vmatpush1.bf16.msra.mxu0 0
    %808 = vmatprep.subr.bf16.mxu0 0
    %809 = vmatpush1.bf16.msra.mxu0 0
    %810 = vmatprep.mubr.bf16.mxu0 0
    %811 = vmatmul.mubr.bf16.gmra.mrb[0].mxu0 %v428
    %v812 = vpop.f32.mrb[0].mxu0
    %v813 = vadd.f32 %v764, %v812
    %v814 = vpop.f32.mrb[0].mxu0
    %v815 = vpop.f32.mrb[0].mxu0
    %v816 = vadd.f32 %v767, %v815
    %v817 = vpop.f32.mrb[0].mxu0
    %818 = vmatprep.mubr.bf16.mxu0 0
    %819 = vmatmul.mubr.bf16.gmra.mrb[0].mxu0 %v433
    %v820 = vpop.f32.mrb[0].mxu0
    %v821 = vadd.f32 %v772, %v820
    %v822 = vpop.f32.mrb[0].mxu0
    %v823 = vpop.f32.mrb[0].mxu0
    %v824 = vadd.f32 %v775, %v823
    %v825 = vpop.f32.mrb[0].mxu0
    %826 = vdwg.mxu0
    %v827 = vadd.f32 %v813, %v816
    %v828 = vadd.f32 %v827, %v821
    %v829 = vadd.f32 %v828, %v824
    %v830 = vrot.slane %v829, 4
    %v831 = vadd.f32 %v829, %v830
    %v832 = vrot.slane %v831, 2
    %v833 = vadd.f32 %v831, %v832
    %v834 = vrot.slane %v833, 1
    %v835 = vadd.f32 %v833, %v834
    %v836 = vrcp.pop 32.0
    %v837 = vmul.f32 %v835, %v836
    %v838 = vsub.f32 %v813, %v837
    %v839 = vsub.f32 %v816, %v837
    %v840 = vsub.f32 %v821, %v837
    %v841 = vsub.f32 %v824, %v837
    %v842 = vmul.f32 %v838, %v838
    %v843 = vmul.f32 %v839, %v839
    %v844 = vmul.f32 %v840, %v840
    %v845 = vmul.f32 %v841, %v841
    %v846 = vadd.f32 %v842, %v843
    %v847 = vadd.f32 %v846, %v844
    %v848 = vadd.f32 %v847, %v845
    %v849 = vrot.slane %v848, 4
    %v850 = vadd.f32 %v848, %v849
    %v851 = vrot.slane %v850, 2
    %v852 = vadd.f32 %v850, %v851
    %v853 = vrot.slane %v852, 1
    %v854 = vadd.f32 %v852, %v853
    %v855 = vmul.f32 %v854, %v836
    %v856 = vadd.f32 %v855, 1e-05
    %v857 = vrsqrt.pop %v856
    %v858 = vmul.f32 %v838, %v857
    %v859 = vmul.f32 %v839, %v857
    %v860 = vmul.f32 %v840, %v857
    %v861 = vmul.f32 %v841, %v857
    %v863 = vlaneseq
    %v864 = vshrl.u32 %v863, 7
    %v865 = vsub.s32 0, %v864
    %v866 = vrot.slane %v361, %v865
    %v868 = vmul.f32 %v858, %v866
    %v869 = vmul.f32 %v859, %v866
    %v870 = vmul.f32 %v860, %v866
    %v871 = vmul.f32 %v861, %v866
    %v873 = vlaneseq
    %v874 = vshrl.u32 %v873, 7
    %v875 = vsub.s32 0, %v874
    %v876 = vrot.slane %v362, %v875
    %v878 = vadd.f32 %v868, %v876
    %v879 = vadd.f32 %v869, %v876
    %v880 = vadd.f32 %v870, %v876
    %v881 = vadd.f32 %v871, %v876
    %v882 = vmax.f32 %v878, 0.0
    %v883 = vmax.f32 %v879, 0.0
    %v884 = vmax.f32 %v880, 0.0
    %v885 = vmax.f32 %v881, 0.0
    %v890 = vcombine.high %v882, %v882
    %v892 = vunpack.c.l.s4 1983009808
    %v893 = vunpack.c.0.s8 %v892
    %v894 = vlaneseq
    %v895 = vshrl.u32 %v894, 7
    %v896 = vsub.s32 %v893, %v895
    %v897 = vrot.slane %v882, %v896
    %v899 = vunpack.c.l.s4 1983009808
    %v900 = vunpack.c.0.s8 %v899
    %v901 = vlaneseq
    %v902 = vshrl.u32 %v901, 7
    %v903 = vsub.s32 %v900, %v902
    %v904 = vrot.slane %v890, %v903
    %v905 = vcombine.high %v897, %v897
    %v906 = vcombine.high %v904, %v904
    %v907 = vcombine.high %v883, %v883
    %v909 = vunpack.c.l.s4 1983009808
    %v910 = vunpack.c.0.s8 %v909
    %v911 = vlaneseq
    %v912 = vshrl.u32 %v911, 7
    %v913 = vsub.s32 %v910, %v912
    %v914 = vrot.slane %v883, %v913
    %v916 = vunpack.c.l.s4 1983009808
    %v917 = vunpack.c.0.s8 %v916
    %v918 = vlaneseq
    %v919 = vshrl.u32 %v918, 7
    %v920 = vsub.s32 %v917, %v919
    %v921 = vrot.slane %v907, %v920
    %v922 = vcombine.high %v914, %v914
    %v923 = vcombine.high %v921, %v921
    %v924 = vcombine.high %v884, %v884
    %v926 = vunpack.c.l.s4 1983009808
    %v927 = vunpack.c.0.s8 %v926
    %v928 = vlaneseq
    %v929 = vshrl.u32 %v928, 7
    %v930 = vsub.s32 %v927, %v929
    %v931 = vrot.slane %v884, %v930
    %v933 = vunpack.c.l.s4 1983009808
    %v934 = vunpack.c.0.s8 %v933
    %v935 = vlaneseq
    %v936 = vshrl.u32 %v935, 7
    %v937 = vsub.s32 %v934, %v936
    %v938 = vrot.slane %v924, %v937
    %v939 = vcombine.high %v931, %v931
    %v940 = vcombine.high %v938, %v938
    %v941 = vcombine.high %v885, %v885
    %v943 = vunpack.c.l.s4 1983009808
    %v944 = vunpack.c.0.s8 %v943
    %v945 = vlaneseq
    %v946 = vshrl.u32 %v945, 7
    %v947 = vsub.s32 %v944, %v946
    %v948 = vrot.slane %v885, %v947
    %v950 = vunpack.c.l.s4 1983009808
    %v951 = vunpack.c.0.s8 %v950
    %v952 = vlaneseq
    %v953 = vshrl.u32 %v952, 7
    %v954 = vsub.s32 %v951, %v953
    %v955 = vrot.slane %v941, %v954
    %v956 = vcombine.high %v948, %v948
    %v957 = vcombine.high %v955, %v955
    %vm974 = vcmask 1041408
    %v975 = vsel %vm974, %v897, -inf
    %v976 = vrot.slane %v975, 4
    %v977 = vmax.f32 %v975, %v976
    %v978 = vrot.slane %v977, 2
    %v979 = vmax.f32 %v977, %v978
    %v980 = vrot.slane %v979, 1
    %v981 = vmax.f32 %v979, %v980
    %v982 = vsel %vm974, %v905, -inf
    %v983 = vrot.slane %v982, 4
    %v984 = vmax.f32 %v982, %v983
    %v985 = vrot.slane %v984, 2
    %v986 = vmax.f32 %v984, %v985
    %v987 = vrot.slane %v986, 1
    %v988 = vmax.f32 %v986, %v987
    %v989 = vsel %vm974, %v904, -inf
    %v990 = vrot.slane %v989, 4
    %v991 = vmax.f32 %v989, %v990
    %v992 = vrot.slane %v991, 2
    %v993 = vmax.f32 %v991, %v992
    %v994 = vrot.slane %v993, 1
    %v995 = vmax.f32 %v993, %v994
    %v996 = vsel %vm974, %v906, -inf
    %v997 = vrot.slane %v996, 4
    %v998 = vmax.f32 %v996, %v997
    %v999 = vrot.slane %v998, 2
    %v1000 = vmax.f32 %v998, %v999
    %v1001 = vrot.slane %v1000, 1
    %v1002 = vmax.f32 %v1000, %v1001
    %v1003 = vsel %vm974, %v914, -inf
    %v1004 = vrot.slane %v1003, 4
    %v1005 = vmax.f32 %v1003, %v1004
    %v1006 = vrot.slane %v1005, 2
    %v1007 = vmax.f32 %v1005, %v1006
    %v1008 = vrot.slane %v1007, 1
    %v1009 = vmax.f32 %v1007, %v1008
    %v1010 = vsel %vm974, %v922, -inf
    %v1011 = vrot.slane %v1010, 4
    %v1012 = vmax.f32 %v1010, %v1011
    %v1013 = vrot.slane %v1012, 2
    %v1014 = vmax.f32 %v1012, %v1013
    %v1015 = vrot.slane %v1014, 1
    %v1016 = vmax.f32 %v1014, %v1015
    %v1017 = vsel %vm974, %v921, -inf
    %v1018 = vrot.slane %v1017, 4
    %v1019 = vmax.f32 %v1017, %v1018
    %v1020 = vrot.slane %v1019, 2
    %v1021 = vmax.f32 %v1019, %v1020
    %v1022 = vrot.slane %v1021, 1
    %v1023 = vmax.f32 %v1021, %v1022
    %v1024 = vsel %vm974, %v923, -inf
    %v1025 = vrot.slane %v1024, 4
    %v1026 = vmax.f32 %v1024, %v1025
    %v1027 = vrot.slane %v1026, 2
    %v1028 = vmax.f32 %v1026, %v1027
    %v1029 = vrot.slane %v1028, 1
    %v1030 = vmax.f32 %v1028, %v1029
    %v1031 = vsel %vm974, %v931, -inf
    %v1032 = vrot.slane %v1031, 4
    %v1033 = vmax.f32 %v1031, %v1032
    %v1034 = vrot.slane %v1033, 2
    %v1035 = vmax.f32 %v1033, %v1034
    %v1036 = vrot.slane %v1035, 1
    %v1037 = vmax.f32 %v1035, %v1036
    %v1038 = vsel %vm974, %v939, -inf
    %v1039 = vrot.slane %v1038, 4
    %v1040 = vmax.f32 %v1038, %v1039
    %v1041 = vrot.slane %v1040, 2
    %v1042 = vmax.f32 %v1040, %v1041
    %v1043 = vrot.slane %v1042, 1
    %v1044 = vmax.f32 %v1042, %v1043
    %v1045 = vsel %vm974, %v938, -inf
    %v1046 = vrot.slane %v1045, 4
    %v1047 = vmax.f32 %v1045, %v1046
    %v1048 = vrot.slane %v1047, 2
    %v1049 = vmax.f32 %v1047, %v1048
    %v1050 = vrot.slane %v1049, 1
    %v1051 = vmax.f32 %v1049, %v1050
    %v1052 = vsel %vm974, %v940, -inf
    %v1053 = vrot.slane %v1052, 4
    %v1054 = vmax.f32 %v1052, %v1053
    %v1055 = vrot.slane %v1054, 2
    %v1056 = vmax.f32 %v1054, %v1055
    %v1057 = vrot.slane %v1056, 1
    %v1058 = vmax.f32 %v1056, %v1057
    %v1059 = vsel %vm974, %v948, -inf
    %v1060 = vrot.slane %v1059, 4
    %v1061 = vmax.f32 %v1059, %v1060
    %v1062 = vrot.slane %v1061, 2
    %v1063 = vmax.f32 %v1061, %v1062
    %v1064 = vrot.slane %v1063, 1
    %v1065 = vmax.f32 %v1063, %v1064
    %v1066 = vsel %vm974, %v956, -inf
    %v1067 = vrot.slane %v1066, 4
    %v1068 = vmax.f32 %v1066, %v1067
    %v1069 = vrot.slane %v1068, 2
    %v1070 = vmax.f32 %v1068, %v1069
    %v1071 = vrot.slane %v1070, 1
    %v1072 = vmax.f32 %v1070, %v1071
    %v1073 = vsel %vm974, %v955, -inf
    %v1074 = vrot.slane %v1073, 4
    %v1075 = vmax.f32 %v1073, %v1074
    %v1076 = vrot.slane %v1075, 2
    %v1077 = vmax.f32 %v1075, %v1076
    %v1078 = vrot.slane %v1077, 1
    %v1079 = vmax.f32 %v1077, %v1078
    %v1080 = vsel %vm974, %v957, -inf
    %v1081 = vrot.slane %v1080, 4
    %v1082 = vmax.f32 %v1080, %v1081
    %v1083 = vrot.slane %v1082, 2
    %v1084 = vmax.f32 %v1082, %v1083
    %v1085 = vrot.slane %v1084, 1
    %v1086 = vmax.f32 %v1084, %v1085
    %v1087 = vld [vmem:[#allocation8] sm:$0xf]
    %v1088 = vld [vmem:[#allocation8 + $0x4] sm:$0xf]
    %v1089 = vld [vmem:[#allocation8 + $0x8] sm:$0xf]
    %v1090 = vld [vmem:[#allocation8 + $0xc] sm:$0xf]
    %v1091 = vld [vmem:[#allocation8 + $0x10] sm:$0xf]
    %v1092 = vld [vmem:[#allocation8 + $0x14] sm:$0xf]
    %v1093 = vld [vmem:[#allocation8 + $0x18] sm:$0xf]
    %v1094 = vld [vmem:[#allocation8 + $0x1c] sm:$0xf]
    %v1095 = vld [vmem:[#allocation8 + $0x20] sm:$0xf]
    %v1096 = vld [vmem:[#allocation8 + $0x24] sm:$0xf]
    %v1097 = vld [vmem:[#allocation8 + $0x28] sm:$0xf]
    %v1098 = vld [vmem:[#allocation8 + $0x2c] sm:$0xf]
    %v1099 = vld [vmem:[#allocation8 + $0x30] sm:$0xf]
    %v1100 = vld [vmem:[#allocation8 + $0x34] sm:$0xf]
    %v1101 = vld [vmem:[#allocation8 + $0x38] sm:$0xf]
    %v1102 = vld [vmem:[#allocation8 + $0x3c] sm:$0xf]
    %v1103 = vld [vmem:[#allocation8 + $0x40] sm:$0xf]
    %v1104 = vld [vmem:[#allocation8 + $0x44] sm:$0xf]
    %v1105 = vld [vmem:[#allocation8 + $0x48] sm:$0xf]
    %v1106 = vld [vmem:[#allocation8 + $0x4c] sm:$0xf]
    %v1107 = vld [vmem:[#allocation8 + $0x50] sm:$0xf]
    %v1108 = vld [vmem:[#allocation8 + $0x54] sm:$0xf]
    %v1109 = vld [vmem:[#allocation8 + $0x58] sm:$0xf]
    %v1110 = vld [vmem:[#allocation8 + $0x5c] sm:$0xf]
    %v1111 = vld [vmem:[#allocation8 + $0x60] sm:$0xf]
    %v1112 = vld [vmem:[#allocation8 + $0x64] sm:$0xf]
    %v1113 = vld [vmem:[#allocation8 + $0x68] sm:$0xf]
    %v1114 = vld [vmem:[#allocation8 + $0x6c] sm:$0xf]
    %v1115 = vld [vmem:[#allocation8 + $0x70] sm:$0xf]
    %v1116 = vld [vmem:[#allocation8 + $0x74] sm:$0xf]
    %v1117 = vld [vmem:[#allocation8 + $0x78] sm:$0xf]
    %v1118 = vld [vmem:[#allocation8 + $0x7c] sm:$0xf]
    %v1119 = vld [vmem:[#allocation8 + $0x80] sm:$0xf]
    %v1120 = vld [vmem:[#allocation8 + $0x84] sm:$0xf]
    %v1121 = vld [vmem:[#allocation8 + $0x88] sm:$0xf]
    %v1122 = vld [vmem:[#allocation8 + $0x8c] sm:$0xf]
    %v1123 = vld [vmem:[#allocation8 + $0x90] sm:$0xf]
    %v1124 = vld [vmem:[#allocation8 + $0x94] sm:$0xf]
    %v1125 = vld [vmem:[#allocation8 + $0x98] sm:$0xf]
    %v1126 = vld [vmem:[#allocation8 + $0x9c] sm:$0xf]
    %v1127 = vld [vmem:[#allocation8 + $0xa0] sm:$0xf]
    %v1128 = vld [vmem:[#allocation8 + $0xa4] sm:$0xf]
    %v1129 = vld [vmem:[#allocation8 + $0xa8] sm:$0xf]
    %v1130 = vld [vmem:[#allocation8 + $0xac] sm:$0xf]
    %v1131 = vld [vmem:[#allocation8 + $0xb0] sm:$0xf]
    %v1132 = vld [vmem:[#allocation8 + $0xb4] sm:$0xf]
    %v1133 = vld [vmem:[#allocation8 + $0xb8] sm:$0xf]
    %v1134 = vld [vmem:[#allocation8 + $0xbc] sm:$0xf]
    %v1135 = vld [vmem:[#allocation8 + $0xc0] sm:$0xf]
    %v1136 = vld [vmem:[#allocation8 + $0xc4] sm:$0xf]
    %v1137 = vld [vmem:[#allocation8 + $0xc8] sm:$0xf]
    %v1138 = vld [vmem:[#allocation8 + $0xcc] sm:$0xf]
    %v1139 = vld [vmem:[#allocation8 + $0xd0] sm:$0xf]
    %v1140 = vld [vmem:[#allocation8 + $0xd4] sm:$0xf]
    %v1141 = vld [vmem:[#allocation8 + $0xd8] sm:$0xf]
    %v1142 = vld [vmem:[#allocation8 + $0xdc] sm:$0xf]
    %v1143 = vld [vmem:[#allocation8 + $0xe0] sm:$0xf]
    %v1144 = vld [vmem:[#allocation8 + $0xe4] sm:$0xf]
    %v1145 = vld [vmem:[#allocation8 + $0xe8] sm:$0xf]
    %v1146 = vld [vmem:[#allocation8 + $0xec] sm:$0xf]
    %v1147 = vld [vmem:[#allocation8 + $0xf0] sm:$0xf]
    %v1148 = vld [vmem:[#allocation8 + $0xf4] sm:$0xf]
    %v1149 = vld [vmem:[#allocation8 + $0xf8] sm:$0xf]
    %v1150 = vld [vmem:[#allocation8 + $0xfc] sm:$0xf]
    %v1151 = vld [vmem:[#allocation8 + $0x100] sm:$0xf]
    %v1152 = vld [vmem:[#allocation8 + $0x104] sm:$0xf]
    %v1153 = vld [vmem:[#allocation8 + $0x108] sm:$0xf]
    %v1154 = vld [vmem:[#allocation8 + $0x10c] sm:$0xf]
    %v1155 = vld [vmem:[#allocation8 + $0x110] sm:$0xf]
    %v1156 = vld [vmem:[#allocation8 + $0x114] sm:$0xf]
    %v1157 = vld [vmem:[#allocation8 + $0x118] sm:$0xf]
    %v1158 = vld [vmem:[#allocation8 + $0x11c] sm:$0xf]
    %v1159 = vld [vmem:[#allocation8 + $0x120] sm:$0xf]
    %v1160 = vld [vmem:[#allocation8 + $0x124] sm:$0xf]
    %v1161 = vld [vmem:[#allocation8 + $0x128] sm:$0xf]
    %v1162 = vld [vmem:[#allocation8 + $0x12c] sm:$0xf]
    %v1163 = vld [vmem:[#allocation8 + $0x130] sm:$0xf]
    %v1164 = vld [vmem:[#allocation8 + $0x134] sm:$0xf]
    %v1165 = vld [vmem:[#allocation8 + $0x138] sm:$0xf]
    %v1166 = vld [vmem:[#allocation8 + $0x13c] sm:$0xf]
    %v1167 = vld [vmem:[%s7] sm:$0x1]
    %v1168 = vld [vmem:[%s8] sm:$0x1]
    %v1169 = vld [vmem:[%s9] sm:$0x1]
    %vm1178 = vcmask 1041409
    %v1179 = vsel %vm1178, %v988, %v981
    %vm1180 = vcmask 1042434
    %v1181 = vsel %vm1180, %v995, %v1179
    %vm1182 = vcmask 1043459
    %v1183 = vsel %vm1182, %v1002, %v1181
    %v1184 = vsel %vm1178, %v1044, %v1037
    %v1185 = vsel %vm1180, %v1051, %v1184
    %v1186 = vsel %vm1182, %v1058, %v1185
    %v1189 = vsel %vm1178, %v995, %v988
    %v1190 = vsel %vm1180, %v1002, %v1189
    %v1191 = vsel %vm1182, %v1009, %v1190
    %v1192 = vsel %vm1178, %v1051, %v1044
    %v1193 = vsel %vm1180, %v1058, %v1192
    %v1194 = vsel %vm1182, %v1065, %v1193
    %v1197 = vsel %vm1178, %v1002, %v995
    %v1198 = vsel %vm1180, %v1009, %v1197
    %v1199 = vsel %vm1182, %v1016, %v1198
    %v1200 = vsel %vm1178, %v1058, %v1051
    %v1201 = vsel %vm1180, %v1065, %v1200
    %v1202 = vsel %vm1182, %v1072, %v1201
    %v1205 = vsel %vm1178, %v1009, %v1002
    %v1206 = vsel %vm1180, %v1016, %v1205
    %v1207 = vsel %vm1182, %v1023, %v1206
    %v1208 = vsel %vm1178, %v1065, %v1058
    %v1209 = vsel %vm1180, %v1072, %v1208
    %v1210 = vsel %vm1182, %v1079, %v1209
    %v1213 = vsel %vm1178, %v1016, %v1009
    %v1214 = vsel %vm1180, %v1023, %v1213
    %v1215 = vsel %vm1182, %v1030, %v1214
    %v1216 = vsel %vm1178, %v1072, %v1065
    %v1217 = vsel %vm1180, %v1079, %v1216
    %v1218 = vsel %vm1182, %v1086, %v1217
    %v1219 = vcombine.low %v1183, %v1191
    %v1220 = vcombine.low %v1199, %v1207
    %v1221 = vcombine.low %v1186, %v1194
    %v1222 = vcombine.low %v1202, %v1210
    %v1223 = vcombine.low %v1219, %v1221
    %v1224 = vcombine.high %v1219, %v1221
    %v1225 = vcombine.low %v1220, %v1222
    %v1226 = vcombine.high %v1220, %v1222
    %v1227 = vcombine.low %v1215, %v1218
    %v1233 = vpack.c.bf16 %v1223, %v1223
    %v1234 = vpack.c.bf16 %v1224, %v1224
    %v1235 = vpack.c.bf16 %v1225, %v1225
    %v1236 = vpack.c.bf16 %v1226, %v1226
    %v1237 = vpack.c.bf16 %v1227, %v1227
    %v1239 = vlaneseq
    %v1240 = vshrl.u32 %v1239, 7
    %v1241 = vsub.s32 0, %v1240
    %v1242 = vrot.slane %v1167, %v1241
    %v1324 = vunpack.c.l.b16 %v1087
    %v1325 = vunpack.c.l.b16 %v1088
    %v1326 = vunpack.c.l.b16 %v1089
    %v1327 = vunpack.c.l.b16 %v1090
    %v1328 = vunpack.c.l.b16 %v1091
    %v1329 = vunpack.c.l.b16 %v1092
    %v1330 = vunpack.c.l.b16 %v1093
    %v1331 = vunpack.c.l.b16 %v1094
    %v1332 = vunpack.c.l.b16 %v1095
    %v1333 = vunpack.c.l.b16 %v1096
    %v1334 = vunpack.c.l.b16 %v1097
    %v1335 = vunpack.c.l.b16 %v1098
    %v1336 = vunpack.c.l.b16 %v1099
    %v1337 = vunpack.c.l.b16 %v1100
    %v1338 = vunpack.c.l.b16 %v1101
    %v1339 = vunpack.c.l.b16 %v1102
    %v1340 = vunpack.c.l.b16 %v1103
    %v1341 = vunpack.c.l.b16 %v1104
    %v1342 = vunpack.c.l.b16 %v1105
    %v1343 = vunpack.c.l.b16 %v1106
    %v1344 = vunpack.c.l.b16 %v1107
    %v1345 = vunpack.c.l.b16 %v1108
    %v1346 = vunpack.c.l.b16 %v1109
    %v1347 = vunpack.c.l.b16 %v1110
    %v1348 = vunpack.c.l.b16 %v1111
    %v1349 = vunpack.c.l.b16 %v1112
    %v1350 = vunpack.c.l.b16 %v1113
    %v1351 = vunpack.c.l.b16 %v1114
    %v1352 = vunpack.c.l.b16 %v1115
    %v1353 = vunpack.c.l.b16 %v1116
    %v1354 = vunpack.c.l.b16 %v1117
    %v1355 = vunpack.c.l.b16 %v1118
    %v1356 = vunpack.c.l.b16 %v1119
    %v1357 = vunpack.c.l.b16 %v1120
    %v1358 = vunpack.c.l.b16 %v1121
    %v1359 = vunpack.c.l.b16 %v1122
    %v1360 = vunpack.c.l.b16 %v1123
    %v1361 = vunpack.c.l.b16 %v1124
    %v1362 = vunpack.c.l.b16 %v1125
    %v1363 = vunpack.c.l.b16 %v1126
    %v1364 = vunpack.c.l.b16 %v1127
    %v1365 = vunpack.c.l.b16 %v1128
    %v1366 = vunpack.c.l.b16 %v1129
    %v1367 = vunpack.c.l.b16 %v1130
    %v1368 = vunpack.c.l.b16 %v1131
    %v1369 = vunpack.c.l.b16 %v1132
    %v1370 = vunpack.c.l.b16 %v1133
    %v1371 = vunpack.c.l.b16 %v1134
    %v1372 = vunpack.c.l.b16 %v1135
    %v1373 = vunpack.c.l.b16 %v1136
    %v1374 = vunpack.c.l.b16 %v1137
    %v1375 = vunpack.c.l.b16 %v1138
    %v1376 = vunpack.c.l.b16 %v1139
    %v1377 = vunpack.c.l.b16 %v1140
    %v1378 = vunpack.c.l.b16 %v1141
    %v1379 = vunpack.c.l.b16 %v1142
    %v1380 = vunpack.c.l.b16 %v1143
    %v1381 = vunpack.c.l.b16 %v1144
    %v1382 = vunpack.c.l.b16 %v1145
    %v1383 = vunpack.c.l.b16 %v1146
    %v1384 = vunpack.c.l.b16 %v1147
    %v1385 = vunpack.c.l.b16 %v1148
    %v1386 = vunpack.c.l.b16 %v1149
    %v1387 = vunpack.c.l.b16 %v1150
    %v1388 = vunpack.c.l.b16 %v1151
    %v1389 = vunpack.c.l.b16 %v1152
    %v1390 = vunpack.c.l.b16 %v1153
    %v1391 = vunpack.c.l.b16 %v1154
    %v1392 = vunpack.c.l.b16 %v1155
    %v1393 = vunpack.c.l.b16 %v1156
    %v1394 = vunpack.c.l.b16 %v1157
    %v1395 = vunpack.c.l.b16 %v1158
    %v1396 = vunpack.c.l.b16 %v1159
    %v1397 = vunpack.c.l.b16 %v1160
    %v1398 = vunpack.c.l.b16 %v1161
    %v1399 = vunpack.c.l.b16 %v1162
    %v1400 = vunpack.c.l.b16 %v1163
    %v1401 = vunpack.c.l.b16 %v1164
    %v1402 = vunpack.c.l.b16 %v1165
    %v1403 = vunpack.c.l.b16 %v1166
    %v1404 = vpack.c.b16 %v1325, %v1324
    %v1405 = vpack.c.b16 %v1327, %v1326
    %v1406 = vpack.c.b16 %v1329, %v1328
    %v1407 = vpack.c.b16 %v1331, %v1330
    %v1408 = vpack.c.b16 %v1333, %v1332
    %v1409 = vpack.c.b16 %v1335, %v1334
    %v1410 = vpack.c.b16 %v1337, %v1336
    %v1411 = vpack.c.b16 %v1339, %v1338
    %v1412 = vpack.c.b16 %v1341, %v1340
    %v1413 = vpack.c.b16 %v1343, %v1342
    %v1414 = vpack.c.b16 %v1345, %v1344
    %v1415 = vpack.c.b16 %v1347, %v1346
    %v1416 = vpack.c.b16 %v1349, %v1348
    %v1417 = vpack.c.b16 %v1351, %v1350
    %v1418 = vpack.c.b16 %v1353, %v1352
    %v1419 = vpack.c.b16 %v1355, %v1354
    %v1420 = vpack.c.b16 %v1357, %v1356
    %v1421 = vpack.c.b16 %v1359, %v1358
    %v1422 = vpack.c.b16 %v1361, %v1360
    %v1423 = vpack.c.b16 %v1363, %v1362
    %v1424 = vpack.c.b16 %v1365, %v1364
    %v1425 = vpack.c.b16 %v1367, %v1366
    %v1426 = vpack.c.b16 %v1369, %v1368
    %v1427 = vpack.c.b16 %v1371, %v1370
    %v1428 = vpack.c.b16 %v1373, %v1372
    %v1429 = vpack.c.b16 %v1375, %v1374
    %v1430 = vpack.c.b16 %v1377, %v1376
    %v1431 = vpack.c.b16 %v1379, %v1378
    %v1432 = vpack.c.b16 %v1381, %v1380
    %v1433 = vpack.c.b16 %v1383, %v1382
    %v1434 = vpack.c.b16 %v1385, %v1384
    %v1435 = vpack.c.b16 %v1387, %v1386
    %v1436 = vpack.c.b16 %v1389, %v1388
    %v1437 = vpack.c.b16 %v1391, %v1390
    %v1438 = vpack.c.b16 %v1393, %v1392
    %v1439 = vpack.c.b16 %v1395, %v1394
    %v1440 = vpack.c.b16 %v1397, %v1396
    %v1441 = vpack.c.b16 %v1399, %v1398
    %v1442 = vpack.c.b16 %v1401, %v1400
    %v1443 = vpack.c.b16 %v1403, %v1402
    %1484 = vmatprep.subr.bf16.mxu0 0
    %1485 = vmatpush1.bf16.msra.mxu0 %v1404
    %1486 = vmatprep.subr.bf16.mxu0 0
    %1487 = vmatpush1.bf16.msra.mxu0 %v1405
    %1488 = vmatprep.subr.bf16.mxu0 0
    %1489 = vmatpush1.bf16.msra.mxu0 %v1406
    %1490 = vmatprep.subr.bf16.mxu0 0
    %1491 = vmatpush1.bf16.msra.mxu0 %v1407
    %1492 = vmatprep.subr.bf16.mxu0 0
    %1493 = vmatpush1.bf16.msra.mxu0 %v1408
    %1494 = vmatprep.subr.bf16.mxu0 0
    %1495 = vmatpush1.bf16.msra.mxu0 %v1409
    %1496 = vmatprep.subr.bf16.mxu0 0
    %1497 = vmatpush1.bf16.msra.mxu0 %v1410
    %1498 = vmatprep.subr.bf16.mxu0 0
    %1499 = vmatpush1.bf16.msra.mxu0 %v1411
    %1500 = vmatprep.subr.bf16.mxu0 0
    %1501 = vmatpush1.bf16.msra.mxu0 %v1412
    %1502 = vmatprep.subr.bf16.mxu0 0
    %1503 = vmatpush1.bf16.msra.mxu0 %v1413
    %1504 = vmatprep.subr.bf16.mxu0 0
    %1505 = vmatpush1.bf16.msra.mxu0 %v1414
    %1506 = vmatprep.subr.bf16.mxu0 0
    %1507 = vmatpush1.bf16.msra.mxu0 %v1415
    %1508 = vmatprep.subr.bf16.mxu0 0
    %1509 = vmatpush1.bf16.msra.mxu0 %v1416
    %1510 = vmatprep.subr.bf16.mxu0 0
    %1511 = vmatpush1.bf16.msra.mxu0 %v1417
    %1512 = vmatprep.subr.bf16.mxu0 0
    %1513 = vmatpush1.bf16.msra.mxu0 %v1418
    %1514 = vmatprep.subr.bf16.mxu0 0
    %1515 = vmatpush1.bf16.msra.mxu0 %v1419
    %1516 = vmatprep.mubr.bf16.mxu0 %v1234
    %1517 = vmatmul.mubr.bf16.gmra.mrb[0].mxu0 %v1233
    %v1518 = vpop.f32.mrb[0].mxu0
    %v1519 = vadd.f32 %v1242, %v1518
    %v1520 = vpop.f32.mrb[0].mxu0
    %v1521 = vpop.f32.mrb[0].mxu0
    %v1522 = vpop.f32.mrb[0].mxu0
    %1523 = vdwg.mxu0
    %1524 = vmatprep.subr.bf16.mxu0 0
    %1525 = vmatpush1.bf16.msra.mxu0 %v1420
    %1526 = vmatprep.subr.bf16.mxu0 0
    %1527 = vmatpush1.bf16.msra.mxu0 %v1421
    %1528 = vmatprep.subr.bf16.mxu0 0
    %1529 = vmatpush1.bf16.msra.mxu0 %v1422
    %1530 = vmatprep.subr.bf16.mxu0 0
    %1531 = vmatpush1.bf16.msra.mxu0 %v1423
    %1532 = vmatprep.subr.bf16.mxu0 0
    %1533 = vmatpush1.bf16.msra.mxu0 %v1424
    %1534 = vmatprep.subr.bf16.mxu0 0
    %1535 = vmatpush1.bf16.msra.mxu0 %v1425
    %1536 = vmatprep.subr.bf16.mxu0 0
    %1537 = vmatpush1.bf16.msra.mxu0 %v1426
    %1538 = vmatprep.subr.bf16.mxu0 0
    %1539 = vmatpush1.bf16.msra.mxu0 %v1427
    %1540 = vmatprep.subr.bf16.mxu0 0
    %1541 = vmatpush1.bf16.msra.mxu0 %v1428
    %1542 = vmatprep.subr.bf16.mxu0 0
    %1543 = vmatpush1.bf16.msra.mxu0 %v1429
    %1544 = vmatprep.subr.bf16.mxu0 0
    %1545 = vmatpush1.bf16.msra.mxu0 %v1430
    %1546 = vmatprep.subr.bf16.mxu0 0
    %1547 = vmatpush1.bf16.msra.mxu0 %v1431
    %1548 = vmatprep.subr.bf16.mxu0 0
    %1549 = vmatpush1.bf16.msra.mxu0 %v1432
    %1550 = vmatprep.subr.bf16.mxu0 0
    %1551 = vmatpush1.bf16.msra.mxu0 %v1433
    %1552 = vmatprep.subr.bf16.mxu0 0
    %1553 = vmatpush1.bf16.msra.mxu0 %v1434
    %1554 = vmatprep.subr.bf16.mxu0 0
    %1555 = vmatpush1.bf16.msra.mxu0 %v1435
    %1556 = vmatprep.mubr.bf16.mxu0 %v1236
    %1557 = vmatmul.mubr.bf16.gmra.mrb[0].mxu0 %v1235
    %v1558 = vpop.f32.mrb[0].mxu0
    %v1559 = vadd.f32 %v1519, %v1558
    %v1560 = vpop.f32.mrb[0].mxu0
    %v1561 = vpop.f32.mrb[0].mxu0
    %v1562 = vpop.f32.mrb[0].mxu0
    %1563 = vdwg.mxu0
    %1564 = vmatprep.subr.bf16.mxu0 0
    %1565 = vmatpush1.bf16.msra.mxu0 %v1436
    %1566 = vmatprep.subr.bf16.mxu0 0
    %1567 = vmatpush1.bf16.msra.mxu0 %v1437
    %1568 = vmatprep.subr.bf16.mxu0 0
    %1569 = vmatpush1.bf16.msra.mxu0 %v1438
    %1570 = vmatprep.subr.bf16.mxu0 0
    %1571 = vmatpush1.bf16.msra.mxu0 %v1439
    %1572 = vmatprep.subr.bf16.mxu0 0
    %1573 = vmatpush1.bf16.msra.mxu0 %v1440
    %1574 = vmatprep.subr.bf16.mxu0 0
    %1575 = vmatpush1.bf16.msra.mxu0 %v1441
    %1576 = vmatprep.subr.bf16.mxu0 0
    %1577 = vmatpush1.bf16.msra.mxu0 %v1442
    %1578 = vmatprep.subr.bf16.mxu0 0
    %1579 = vmatpush1.bf16.msra.mxu0 %v1443
    %1580 = vmatprep.subr.bf16.mxu0 0
    %1581 = vmatpush1.bf16.msra.mxu0 0
    %1582 = vmatprep.subr.bf16.mxu0 0
    %1583 = vmatpush1.bf16.msra.mxu0 0
    %1584 = vmatprep.subr.bf16.mxu0 0
    %1585 = vmatpush1.bf16.msra.mxu0 0
    %1586 = vmatprep.subr.bf16.mxu0 0
    %1587 = vmatpush1.bf16.msra.mxu0 0
    %1588 = vmatprep.subr.bf16.mxu0 0
    %1589 = vmatpush1.bf16.msra.mxu0 0
    %1590 = vmatprep.subr.bf16.mxu0 0
    %1591 = vmatpush1.bf16.msra.mxu0 0
    %1592 = vmatprep.subr.bf16.mxu0 0
    %1593 = vmatpush1.bf16.msra.mxu0 0
    %1594 = vmatprep.subr.bf16.mxu0 0
    %1595 = vmatpush1.bf16.msra.mxu0 0
    %1596 = vmatprep.mubr.bf16.mxu0 0
    %1597 = vmatmul.mubr.bf16.gmra.mrb[0].mxu0 %v1237
    %v1598 = vpop.f32.mrb[0].mxu0
    %v1599 = vadd.f32 %v1559, %v1598
    %v1600 = vpop.f32.mrb[0].mxu0
    %v1601 = vpop.f32.mrb[0].mxu0
    %v1602 = vpop.f32.mrb[0].mxu0
    %1603 = vdwg.mxu0
    %v1604 = vrot.slane %v1599, 4
    %v1605 = vadd.f32 %v1599, %v1604
    %v1606 = vrot.slane %v1605, 2
    %v1607 = vadd.f32 %v1605, %v1606
    %v1608 = vrot.slane %v1607, 1
    %v1609 = vadd.f32 %v1607, %v1608
    %v1610 = vrcp.pop 8.0
    %v1611 = vmul.f32 %v1609, %v1610
    %v1612 = vsub.f32 %v1599, %v1611
    %v1613 = vmul.f32 %v1612, %v1612
    %v1614 = vrot.slane %v1613, 4
    %v1615 = vadd.f32 %v1613, %v1614
    %v1616 = vrot.slane %v1615, 2
    %v1617 = vadd.f32 %v1615, %v1616
    %v1618 = vrot.slane %v1617, 1
    %v1619 = vadd.f32 %v1617, %v1618
    %v1620 = vmul.f32 %v1619, %v1610
    %v1621 = vadd.f32 %v1620, 1e-05
    %v1622 = vrsqrt.pop %v1621
    %v1623 = vmul.f32 %v1612, %v1622
    %v1625 = vlaneseq
    %v1626 = vshrl.u32 %v1625, 7
    %v1627 = vsub.s32 0, %v1626
    %v1628 = vrot.slane %v1168, %v1627
    %v1630 = vmul.f32 %v1623, %v1628
    %v1632 = vlaneseq
    %v1633 = vshrl.u32 %v1632, 7
    %v1634 = vsub.s32 0, %v1633
    %v1635 = vrot.slane %v1169, %v1634
    %v1637 = vadd.f32 %v1630, %v1635
    %v1638 = vmax.f32 %v1637, 0.0
    %v1640 = vcombine.high %v1638, %v1638
    %v1642 = vunpack.c.l.s4 1983009808
    %v1643 = vunpack.c.0.s8 %v1642
    %v1644 = vlaneseq
    %v1645 = vshrl.u32 %v1644, 7
    %v1646 = vsub.s32 %v1643, %v1645
    %v1647 = vrot.slane %v1638, %v1646
    %v1649 = vunpack.c.l.s4 1983009808
    %v1650 = vunpack.c.0.s8 %v1649
    %v1651 = vlaneseq
    %v1652 = vshrl.u32 %v1651, 7
    %v1653 = vsub.s32 %v1650, %v1652
    %v1654 = vrot.slane %v1640, %v1653
    %v1655 = vcombine.high %v1647, %v1647
    %v1656 = vcombine.high %v1654, %v1654
    %v1661 = vsel %vm974, %v1647, -inf
    %v1662 = vrot.slane %v1661, 4
    %v1663 = vmax.f32 %v1661, %v1662
    %v1664 = vrot.slane %v1663, 2
    %v1665 = vmax.f32 %v1663, %v1664
    %v1666 = vrot.slane %v1665, 1
    %v1667 = vmax.f32 %v1665, %v1666
    %v1668 = vsel %vm974, %v1655, -inf
    %v1669 = vrot.slane %v1668, 4
    %v1670 = vmax.f32 %v1668, %v1669
    %v1671 = vrot.slane %v1670, 2
    %v1672 = vmax.f32 %v1670, %v1671
    %v1673 = vrot.slane %v1672, 1
    %v1674 = vmax.f32 %v1672, %v1673
    %v1675 = vsel %vm974, %v1654, -inf
    %v1676 = vrot.slane %v1675, 4
    %v1677 = vmax.f32 %v1675, %v1676
    %v1678 = vrot.slane %v1677, 2
    %v1679 = vmax.f32 %v1677, %v1678
    %v1680 = vrot.slane %v1679, 1
    %v1681 = vmax.f32 %v1679, %v1680
    %v1682 = vsel %vm974, %v1656, -inf
    %v1683 = vrot.slane %v1682, 4
    %v1684 = vmax.f32 %v1682, %v1683
    %v1685 = vrot.slane %v1684, 2
    %v1686 = vmax.f32 %v1684, %v1685
    %v1687 = vrot.slane %v1686, 1
    %v1688 = vmax.f32 %v1686, %v1687
    %v1693 = vsel %vm1178, %v1674, %v1667
    %v1694 = vsel %vm1178, %v1688, %v1681
    %1697 = vst [vmem:[#allocation10] sm:$0x3] %v1693
    %1698 = vst [vmem:[#allocation10 + $0x2] sm:$0x3] %v1694
    // Predicated region
    $region58: #{tpu_custom_call.1} parent=1 // pred_check
      _
    $region59: #{tpu_custom_call.1} parent=1 // pred_check_branch
      %1700 = sbr.rel (0) target = $region61
    $region60: #{tpu_custom_call.1} parent=1 // pred_region
      %s1702 = ssub.s32 64, 64
      %1703 = vsyncadd [#allocation4], %s1702
      %s1704 = sshll.u32 [#allocation10], 4
      %s1705 = int_to_ptr.vmem [resolvable:$true] %s1704
      %1710 = dma.vmem_to_hbm [thread:$0]  %s1705, 64, %s10, [#allocation4], 32, 32, 2
    $region61: #{tpu_custom_call.1} parent=1 // pred_fallthru
      _
    // Predicated region
    $region62: #{tpu_custom_call.1} parent=1 // pred_check
      _
    $region63: #{tpu_custom_call.1} parent=1 // pred_check_branch
      %1712 = sbr.rel (0) target = $region65
    $region64: #{tpu_custom_call.1} parent=1 // pred_region
      %1713 = dma.done [#allocation4], 64
    $region65: #{tpu_custom_call.1} parent=1 // pred_fallthru
      _
    %1714 = vsyncpa [#allocation3], 1
    %1715 = vsyncpa [#allocation6], 1
    %1716 = vsyncpa [#allocation9], 1
    %1717 = vsyncpa [#allocation4], 1

</llo_original>
